<compile_context>
chip_gen: v6e
topology: v6e:2x2x1
jax: 0.10.0
libtpu: 0.0.40
codegen_flags: <defaults>
</compile_context>

<pallas_src>
import jax
import jax.numpy as jnp
from jax import lax
from jax.experimental import pallas as pl
from jax.experimental.pallas import tpu as pltpu

# ---- small, TPU-friendly synthetic config -------------------------------
B = 2              # batch
S = 8              # sequence length
H = 32             # hidden size
NUM_HEADS = 4
HEAD_DIM = H // NUM_HEADS
FFN = 4 * H        # 128
NUM_LABELS = 4
VOCAB = 100
VOCAB_PAD = 104    # token table padded so positional rows start 8-aligned
EPS = 1e-12        # BERT-style layernorm eps
LANES = 128

# W_A slab (32 lanes wide), sublane-stacked
OFF_WQ = 0
OFF_WK = H
OFF_WV = 2 * H
OFF_WO = 3 * H
OFF_W2 = 4 * H
OFF_SEGT = 4 * H + FFN          # (LANES, H) head->lane one-hot; rows >= NUM_HEADS are zero
WA_ROWS = OFF_SEGT + LANES      # 384

# W_B slab (128 lanes wide), sublane-stacked
OFF_W1 = 0
OFF_WC = H
OFF_SEG = 2 * H                 # (H, LANES) lane->head one-hot; lanes >= NUM_HEADS are zero
VEC_BASE = 3 * H                # bias / layernorm rows
R_BQ, R_BK, R_BV, R_BO = 0, 1, 2, 3
R_LN1G, R_LN1B = 4, 5
R_B2 = 6
R_LN2G, R_LN2B = 7, 8
R_B1 = 9
R_BC = 10
VEC_ROWS = 16
WB_ROWS = VEC_BASE + VEC_ROWS   # 112


def _layer_norm(x, g, b):
    mu = jnp.mean(x, axis=-1, keepdims=True)
    var = jnp.mean((x - mu) ** 2, axis=-1, keepdims=True)
    return (x - mu) * lax.rsqrt(var + EPS) * g + b


def fused_model_kernel(ids_ref, mask_ref, emb_ref, wa_ref, wb_ref, out_ref,
                       xs_ref, xcls_ref, bias_ref):
    """Embedding gather + one encoder layer (CLS path) + classifier, one shot."""
    # ---- embedding gather + additive key-mask bias, driven by SMEM scalars ----
    for i in range(B * S):                                   # tiny, fully unrolled
        bi, si = divmod(i, S)
        tok_row = emb_ref[pl.ds(ids_ref[bi, si], 1), :]      # (1, H) dynamic row read
        xs_ref[pl.ds(i, 1), :] = tok_row
        if si == 0:                                          # capture CLS rows
            xcls_ref[pl.ds(bi, 1), :] = tok_row
        keep = mask_ref[bi, si].astype(jnp.float32)          # 1 keep / 0 pad
        bias_ref[pl.ds(i, 1), :] = jnp.full((1, LANES), (keep - 1.0) * 1e9,
                                            jnp.float32)

    pos = emb_ref[VOCAB_PAD:VOCAB_PAD + S, :]                # (S, H) positional rows
    x_flat = xs_ref[...] + jnp.tile(pos, (B, 1))             # (B*S, H)
    x_cls = xcls_ref[...] + pos[0:1, :]                      # (B, H)
    neg = bias_ref[...]                                      # (B*S, LANES) additive mask

    # ---- static weight views (8-aligned sublane slices of the two slabs) ----
    wq = wa_ref[OFF_WQ:OFF_WQ + H, :]                        # 1/sqrt(head_dim) folded in
    wk = wa_ref[OFF_WK:OFF_WK + H, :]
    wv = wa_ref[OFF_WV:OFF_WV + H, :]
    wo = wa_ref[OFF_WO:OFF_WO + H, :]
    w2 = wa_ref[OFF_W2:OFF_W2 + FFN, :]
    seg_t = wa_ref[OFF_SEGT:OFF_SEGT + LANES, :]
    w1 = wb_ref[OFF_W1:OFF_W1 + H, :]
    wc = wb_ref[OFF_WC:OFF_WC + H, :]
    seg = wb_ref[OFF_SEG:OFF_SEG + H, :]
    vec = wb_ref[VEC_BASE:VEC_BASE + VEC_ROWS, :]

    # ---- attention (CLS query only; block-diagonal heads via one-hot maps) ----
    q = jnp.dot(x_cls, wq, preferred_element_type=jnp.float32) + vec[R_BQ:R_BQ + 1, :H]
    k = jnp.dot(x_flat, wk, preferred_element_type=jnp.float32) + vec[R_BK:R_BK + 1, :H]
    v = jnp.dot(x_flat, wv, preferred_element_type=jnp.float32) + vec[R_BV:R_BV + 1, :H]

    #   e[b*S+j, c] = q[b, c] * k[b*S+j, c];  scores[bj, h] = sum_{c in head h} e[bj, c]
    e = (q[:, None, :] * k.reshape(B, S, H)).reshape(B * S, H)
    scores = jnp.dot(e, seg, preferred_element_type=jnp.float32) + neg   # (B*S, LANES); lanes>=NH inert

    # softmax over key positions within each batch element
    s3 = scores.reshape(B, S, LANES)
    s3 = s3 - jnp.max(s3, axis=1, keepdims=True)
    p3 = jnp.exp(s3)
    p3 = p3 / jnp.sum(p3, axis=1, keepdims=True)
    p = p3.reshape(B * S, LANES)

    # context: broadcast head prob across its HEAD_DIM lanes, weight V, sum over j
    pw = jnp.dot(p, seg_t, preferred_element_type=jnp.float32)           # (B*S, H)
    ctx = jnp.sum((pw * v).reshape(B, S, H), axis=1)                     # (B, H)

    attn = jnp.dot(ctx, wo, preferred_element_type=jnp.float32) + vec[R_BO:R_BO + 1, :H]
    h1 = _layer_norm(x_cls + attn, vec[R_LN1G:R_LN1G + 1, :H], vec[R_LN1B:R_LN1B + 1, :H])

    # ---- feed-forward (CLS rows only) ----
    ff = jnp.dot(h1, w1, preferred_element_type=jnp.float32) + vec[R_B1:R_B1 + 1, :]
    ff = jax.nn.gelu(ff)      # tanh approx; HF BERT uses exact erf GELU (synthetic encoder anyway)
    ff = jnp.dot(ff, w2, preferred_element_type=jnp.float32) + vec[R_B2:R_B2 + 1, :H]
    h2 = _layer_norm(h1 + ff, vec[R_LN2G:R_LN2G + 1, :H], vec[R_LN2B:R_LN2B + 1, :H])

    # dropout = identity at inference; classifier; slice to NUM_LABELS in-kernel
    logits = jnp.dot(h2, wc, preferred_element_type=jnp.float32) + vec[R_BC:R_BC + 1, :]
    out_ref[...] = logits[:, :NUM_LABELS]


def pack_params(params, tok_emb, pos_emb):
    """Pack 18 raw params + embeddings into 3 slabs (emb, W_A, W_B)."""
    (wq, bq, wk, bk, wv, bv, wo, bo, ln1g, ln1b,
     w1, b1, w2, b2, ln2g, ln2b, wc, bc) = params
    scale = 1.0 / (HEAD_DIM ** 0.5)

    # one-hot lane<->head maps, precomputed on the host
    seg = (jnp.arange(H)[:, None] // HEAD_DIM
           == jnp.arange(NUM_HEADS)[None, :]).astype(jnp.float32)        # (H, NH)
    seg_pad = jnp.zeros((H, LANES), jnp.float32).at[:, :NUM_HEADS].set(seg)
    seg_t_pad = jnp.zeros((LANES, H), jnp.float32).at[:NUM_HEADS, :].set(seg.T)

    wa = jnp.concatenate([wq * scale, wk, wv, wo, w2, seg_t_pad], axis=0)  # (WA_ROWS, H)
    assert wa.shape == (WA_ROWS, H)

    def row(vv):
        vv = jnp.asarray(vv, jnp.float32).reshape(-1)
        return jnp.zeros((LANES,), jnp.float32).at[: vv.shape[0]].set(vv)

    vec = jnp.zeros((VEC_ROWS, LANES), jnp.float32)
    for r, vv in ((R_BQ, bq * scale), (R_BK, bk), (R_BV, bv), (R_BO, bo),
                  (R_LN1G, ln1g), (R_LN1B, ln1b), (R_B2, b2),
                  (R_LN2G, ln2g), (R_LN2B, ln2b), (R_B1, b1), (R_BC, bc)):
        vec = vec.at[r].set(row(vv))

    wc_pad = jnp.zeros((H, LANES), jnp.float32).at[:, :NUM_LABELS].set(wc)
    wb = jnp.concatenate([w1, wc_pad, seg_pad, vec], axis=0)              # (WB_ROWS, LANES)
    assert wb.shape == (WB_ROWS, LANES)

    tok_pad = jnp.zeros((VOCAB_PAD, H), jnp.float32).at[:VOCAB].set(tok_emb)
    emb = jnp.concatenate([tok_pad, pos_emb], axis=0)                     # (VOCAB_PAD + S, H)
    return emb, wa, wb


@jax.jit
def base_model_forward(input_ids, attention_mask, emb, wa, wb):
    """BaseModel.forward: encoder -> CLS -> dropout(identity) -> classifier."""
    return pl.pallas_call(
        fused_model_kernel,
        out_shape=jax.ShapeDtypeStruct((B, NUM_LABELS), jnp.float32),
        in_specs=[
            pl.BlockSpec(memory_space=pltpu.MemorySpace.SMEM),   # input_ids (scalars)
            pl.BlockSpec(memory_space=pltpu.MemorySpace.SMEM),   # attention_mask (scalars)
            pl.BlockSpec(memory_space=pltpu.MemorySpace.VMEM),   # token+pos embedding slab
            pl.BlockSpec(memory_space=pltpu.MemorySpace.VMEM),   # 32-lane weight slab (W_A)
            pl.BlockSpec(memory_space=pltpu.MemorySpace.VMEM),   # 128-lane weight/bias slab (W_B)
        ],
        out_specs=pl.BlockSpec(memory_space=pltpu.MemorySpace.VMEM),
        scratch_shapes=[
            pltpu.VMEM((B * S, H), jnp.float32),       # gathered token embeddings
            pltpu.VMEM((B, H), jnp.float32),           # CLS token embeddings
            pltpu.VMEM((B * S, LANES), jnp.float32),   # additive key-mask bias
        ],
    )(input_ids, attention_mask, emb, wa, wb)


def init_params(key):
    ks = jax.random.split(key, 9)
    w = lambda k, shp: (0.02 * jax.random.normal(k, shp)).astype(jnp.float32)
    zeros = lambda shp: jnp.zeros(shp, jnp.float32)
    ones = lambda shp: jnp.ones(shp, jnp.float32)
    params = (
        w(ks[0], (H, H)), zeros((H,)),             # Wq, bq
        w(ks[1], (H, H)), zeros((H,)),             # Wk, bk
        w(ks[2], (H, H)), zeros((H,)),             # Wv, bv
        w(ks[3], (H, H)), zeros((H,)),             # Wo, bo
        ones((H,)), zeros((H,)),                   # ln1 gamma, beta
        w(ks[4], (H, FFN)), zeros((FFN,)),         # W1, b1
        w(ks[5], (FFN, H)), zeros((H,)),           # W2, b2
        ones((H,)), zeros((H,)),                   # ln2 gamma, beta
        w(ks[6], (H, NUM_LABELS)), zeros((NUM_LABELS,)),   # classifier W, b
    )
    tok_emb = w(ks[7], (VOCAB, H))
    pos_emb = w(ks[8], (S, H))
    return params, tok_emb, pos_emb


if __name__ == "__main__":
    key = jax.random.PRNGKey(0)
    k_ids, k_params = jax.random.split(key)

    params, tok_emb, pos_emb = init_params(k_params)
    emb, wa, wb = pack_params(params, tok_emb, pos_emb)

    input_ids = jax.random.randint(k_ids, (B, S), 0, VOCAB, dtype=jnp.int32)
    attention_mask = jnp.ones((B, S), jnp.int32).at[1, 6:].set(0)   # pad tail of 2nd seq

    logits = base_model_forward(input_ids, attention_mask, emb, wa, wb)
    jax.block_until_ready(logits)
    assert logits.shape == (B, NUM_LABELS) and logits.dtype == jnp.float32
    assert bool(jnp.all(jnp.isfinite(logits)))
    print("KERNEL_OK")
</pallas_src>

<mosaic_0001>
module attributes {stable_mosaic.version = 11 : i64} {
  func.func @fused_model_kernel(%arg0: memref<2x8xi32, #tpu.memory_space<smem>>, %arg1: memref<2x8xi32, #tpu.memory_space<smem>>, %arg2: memref<112x32xf32, #tpu.memory_space<vmem>>, %arg3: memref<384x32xf32, #tpu.memory_space<vmem>>, %arg4: memref<112x128xf32, #tpu.memory_space<vmem>>, %arg5: memref<2x4xf32, #tpu.memory_space<vmem>>, %arg6: memref<16x32xf32, #tpu.memory_space<vmem>>, %arg7: memref<2x32xf32, #tpu.memory_space<vmem>>, %arg8: memref<16x128xf32, #tpu.memory_space<vmem>>) attributes {dimension_semantics = [], scalar_prefetch = 0 : i64, scratch_operands = 3 : i64, tpu.core_type = #tpu.core_type<tc>} {
    %c0 = arith.constant 0 : index
    %c0_0 = arith.constant 0 : index
    %0 = memref.load %arg0[%c0, %c0_0] : memref<2x8xi32, #tpu.memory_space<smem>>
    %1 = arith.index_cast %0 : i32 to index
    %c0_1 = arith.constant 0 : index
    %2 = vector.load %arg2[%1, %c0_1] : memref<112x32xf32, #tpu.memory_space<vmem>>, vector<1x32xf32>
    %c0_2 = arith.constant 0 : index
    %c0_3 = arith.constant 0 : index
    %3 = vector.load %arg6[%c0_2, %c0_3] : memref<16x32xf32, #tpu.memory_space<vmem>>, vector<1x32xf32>
    tpu.vector_store %arg6[%c0_2, %c0_3], %2 {strides = array<i32>} : memref<16x32xf32, #tpu.memory_space<vmem>>, vector<1x32xf32>,
    %c0_4 = arith.constant 0 : index
    %c0_5 = arith.constant 0 : index
    %4 = vector.load %arg7[%c0_4, %c0_5] : memref<2x32xf32, #tpu.memory_space<vmem>>, vector<1x32xf32>
    tpu.vector_store %arg7[%c0_4, %c0_5], %2 {strides = array<i32>} : memref<2x32xf32, #tpu.memory_space<vmem>>, vector<1x32xf32>,
    %c0_6 = arith.constant 0 : index
    %c0_7 = arith.constant 0 : index
    %5 = memref.load %arg1[%c0_6, %c0_7] : memref<2x8xi32, #tpu.memory_space<smem>>
    %6 = arith.sitofp %5 : i32 to f32
    %cst = arith.constant 1.000000e+00 : f32
    %7 = arith.subf %6, %cst : f32
    %cst_8 = arith.constant 1.000000e+09 : f32
    %8 = arith.mulf %7, %cst_8 : f32
    %9 = vector.broadcast %8 : f32 to vector<1x128xf32>
    %c0_9 = arith.constant 0 : index
    %c0_10 = arith.constant 0 : index
    %10 = vector.load %arg8[%c0_9, %c0_10] : memref<16x128xf32, #tpu.memory_space<vmem>>, vector<1x128xf32>
    tpu.vector_store %arg8[%c0_9, %c0_10], %9 {strides = array<i32>} : memref<16x128xf32, #tpu.memory_space<vmem>>, vector<1x128xf32>,
    %c0_11 = arith.constant 0 : index
    %c1 = arith.constant 1 : index
    %11 = memref.load %arg0[%c0_11, %c1] : memref<2x8xi32, #tpu.memory_space<smem>>
    %12 = arith.index_cast %11 : i32 to index
    %c0_12 = arith.constant 0 : index
    %13 = vector.load %arg2[%12, %c0_12] : memref<112x32xf32, #tpu.memory_space<vmem>>, vector<1x32xf32>
    %c1_13 = arith.constant 1 : index
    %c0_14 = arith.constant 0 : index
    %14 = vector.load %arg6[%c1_13, %c0_14] : memref<16x32xf32, #tpu.memory_space<vmem>>, vector<1x32xf32>
    tpu.vector_store %arg6[%c1_13, %c0_14], %13 {strides = array<i32>} : memref<16x32xf32, #tpu.memory_space<vmem>>, vector<1x32xf32>,
    %c0_15 = arith.constant 0 : index
    %c1_16 = arith.constant 1 : index
    %15 = memref.load %arg1[%c0_15, %c1_16] : memref<2x8xi32, #tpu.memory_space<smem>>
    %16 = arith.sitofp %15 : i32 to f32
    %cst_17 = arith.constant 1.000000e+00 : f32
    %17 = arith.subf %16, %cst_17 : f32
    %cst_18 = arith.constant 1.000000e+09 : f32
    %18 = arith.mulf %17, %cst_18 : f32
    %19 = vector.broadcast %18 : f32 to vector<1x128xf32>
    %c1_19 = arith.constant 1 : index
    %c0_20 = arith.constant 0 : index
    %20 = vector.load %arg8[%c1_19, %c0_20] : memref<16x128xf32, #tpu.memory_space<vmem>>, vector<1x128xf32>
    tpu.vector_store %arg8[%c1_19, %c0_20], %19 {strides = array<i32>} : memref<16x128xf32, #tpu.memory_space<vmem>>, vector<1x128xf32>,
    %c0_21 = arith.constant 0 : index
    %c2 = arith.constant 2 : index
    %21 = memref.load %arg0[%c0_21, %c2] : memref<2x8xi32, #tpu.memory_space<smem>>
    %22 = arith.index_cast %21 : i32 to index
    %c0_22 = arith.constant 0 : index
    %23 = vector.load %arg2[%22, %c0_22] : memref<112x32xf32, #tpu.memory_space<vmem>>, vector<1x32xf32>
    %c2_23 = arith.constant 2 : index
    %c0_24 = arith.constant 0 : index
    %24 = vector.load %arg6[%c2_23, %c0_24] : memref<16x32xf32, #tpu.memory_space<vmem>>, vector<1x32xf32>
    tpu.vector_store %arg6[%c2_23, %c0_24], %23 {strides = array<i32>} : memref<16x32xf32, #tpu.memory_space<vmem>>, vector<1x32xf32>,
    %c0_25 = arith.constant 0 : index
    %c2_26 = arith.constant 2 : index
    %25 = memref.load %arg1[%c0_25, %c2_26] : memref<2x8xi32, #tpu.memory_space<smem>>
    %26 = arith.sitofp %25 : i32 to f32
    %cst_27 = arith.constant 1.000000e+00 : f32
    %27 = arith.subf %26, %cst_27 : f32
    %cst_28 = arith.constant 1.000000e+09 : f32
    %28 = arith.mulf %27, %cst_28 : f32
    %29 = vector.broadcast %28 : f32 to vector<1x128xf32>
    %c2_29 = arith.constant 2 : index
    %c0_30 = arith.constant 0 : index
    %30 = vector.load %arg8[%c2_29, %c0_30] : memref<16x128xf32, #tpu.memory_space<vmem>>, vector<1x128xf32>
    tpu.vector_store %arg8[%c2_29, %c0_30], %29 {strides = array<i32>} : memref<16x128xf32, #tpu.memory_space<vmem>>, vector<1x128xf32>,
    %c0_31 = arith.constant 0 : index
    %c3 = arith.constant 3 : index
    %31 = memref.load %arg0[%c0_31, %c3] : memref<2x8xi32, #tpu.memory_space<smem>>
    %32 = arith.index_cast %31 : i32 to index
    %c0_32 = arith.constant 0 : index
    %33 = vector.load %arg2[%32, %c0_32] : memref<112x32xf32, #tpu.memory_space<vmem>>, vector<1x32xf32>
    %c3_33 = arith.constant 3 : index
    %c0_34 = arith.constant 0 : index
    %34 = vector.load %arg6[%c3_33, %c0_34] : memref<16x32xf32, #tpu.memory_space<vmem>>, vector<1x32xf32>
    tpu.vector_store %arg6[%c3_33, %c0_34], %33 {strides = array<i32>} : memref<16x32xf32, #tpu.memory_space<vmem>>, vector<1x32xf32>,
    %c0_35 = arith.constant 0 : index
    %c3_36 = arith.constant 3 : index
    %35 = memref.load %arg1[%c0_35, %c3_36] : memref<2x8xi32, #tpu.memory_space<smem>>
    %36 = arith.sitofp %35 : i32 to f32
    %cst_37 = arith.constant 1.000000e+00 : f32
    %37 = arith.subf %36, %cst_37 : f32
    %cst_38 = arith.constant 1.000000e+09 : f32
    %38 = arith.mulf %37, %cst_38 : f32
    %39 = vector.broadcast %38 : f32 to vector<1x128xf32>
    %c3_39 = arith.constant 3 : index
    %c0_40 = arith.constant 0 : index
    %40 = vector.load %arg8[%c3_39, %c0_40] : memref<16x128xf32, #tpu.memory_space<vmem>>, vector<1x128xf32>
    tpu.vector_store %arg8[%c3_39, %c0_40], %39 {strides = array<i32>} : memref<16x128xf32, #tpu.memory_space<vmem>>, vector<1x128xf32>,
    %c0_41 = arith.constant 0 : index
    %c4 = arith.constant 4 : index
    %41 = memref.load %arg0[%c0_41, %c4] : memref<2x8xi32, #tpu.memory_space<smem>>
    %42 = arith.index_cast %41 : i32 to index
    %c0_42 = arith.constant 0 : index
    %43 = vector.load %arg2[%42, %c0_42] : memref<112x32xf32, #tpu.memory_space<vmem>>, vector<1x32xf32>
    %c4_43 = arith.constant 4 : index
    %c0_44 = arith.constant 0 : index
    %44 = vector.load %arg6[%c4_43, %c0_44] : memref<16x32xf32, #tpu.memory_space<vmem>>, vector<1x32xf32>
    tpu.vector_store %arg6[%c4_43, %c0_44], %43 {strides = array<i32>} : memref<16x32xf32, #tpu.memory_space<vmem>>, vector<1x32xf32>,
    %c0_45 = arith.constant 0 : index
    %c4_46 = arith.constant 4 : index
    %45 = memref.load %arg1[%c0_45, %c4_46] : memref<2x8xi32, #tpu.memory_space<smem>>
    %46 = arith.sitofp %45 : i32 to f32
    %cst_47 = arith.constant 1.000000e+00 : f32
    %47 = arith.subf %46, %cst_47 : f32
    %cst_48 = arith.constant 1.000000e+09 : f32
    %48 = arith.mulf %47, %cst_48 : f32
    %49 = vector.broadcast %48 : f32 to vector<1x128xf32>
    %c4_49 = arith.constant 4 : index
    %c0_50 = arith.constant 0 : index
    %50 = vector.load %arg8[%c4_49, %c0_50] : memref<16x128xf32, #tpu.memory_space<vmem>>, vector<1x128xf32>
    tpu.vector_store %arg8[%c4_49, %c0_50], %49 {strides = array<i32>} : memref<16x128xf32, #tpu.memory_space<vmem>>, vector<1x128xf32>,
    %c0_51 = arith.constant 0 : index
    %c5 = arith.constant 5 : index
    %51 = memref.load %arg0[%c0_51, %c5] : memref<2x8xi32, #tpu.memory_space<smem>>
    %52 = arith.index_cast %51 : i32 to index
    %c0_52 = arith.constant 0 : index
    %53 = vector.load %arg2[%52, %c0_52] : memref<112x32xf32, #tpu.memory_space<vmem>>, vector<1x32xf32>
    %c5_53 = arith.constant 5 : index
    %c0_54 = arith.constant 0 : index
    %54 = vector.load %arg6[%c5_53, %c0_54] : memref<16x32xf32, #tpu.memory_space<vmem>>, vector<1x32xf32>
    tpu.vector_store %arg6[%c5_53, %c0_54], %53 {strides = array<i32>} : memref<16x32xf32, #tpu.memory_space<vmem>>, vector<1x32xf32>,
    %c0_55 = arith.constant 0 : index
    %c5_56 = arith.constant 5 : index
    %55 = memref.load %arg1[%c0_55, %c5_56] : memref<2x8xi32, #tpu.memory_space<smem>>
    %56 = arith.sitofp %55 : i32 to f32
    %cst_57 = arith.constant 1.000000e+00 : f32
    %57 = arith.subf %56, %cst_57 : f32
    %cst_58 = arith.constant 1.000000e+09 : f32
    %58 = arith.mulf %57, %cst_58 : f32
    %59 = vector.broadcast %58 : f32 to vector<1x128xf32>
    %c5_59 = arith.constant 5 : index
    %c0_60 = arith.constant 0 : index
    %60 = vector.load %arg8[%c5_59, %c0_60] : memref<16x128xf32, #tpu.memory_space<vmem>>, vector<1x128xf32>
    tpu.vector_store %arg8[%c5_59, %c0_60], %59 {strides = array<i32>} : memref<16x128xf32, #tpu.memory_space<vmem>>, vector<1x128xf32>,
    %c0_61 = arith.constant 0 : index
    %c6 = arith.constant 6 : index
    %61 = memref.load %arg0[%c0_61, %c6] : memref<2x8xi32, #tpu.memory_space<smem>>
    %62 = arith.index_cast %61 : i32 to index
    %c0_62 = arith.constant 0 : index
    %63 = vector.load %arg2[%62, %c0_62] : memref<112x32xf32, #tpu.memory_space<vmem>>, vector<1x32xf32>
    %c6_63 = arith.constant 6 : index
    %c0_64 = arith.constant 0 : index
    %64 = vector.load %arg6[%c6_63, %c0_64] : memref<16x32xf32, #tpu.memory_space<vmem>>, vector<1x32xf32>
    tpu.vector_store %arg6[%c6_63, %c0_64], %63 {strides = array<i32>} : memref<16x32xf32, #tpu.memory_space<vmem>>, vector<1x32xf32>,
    %c0_65 = arith.constant 0 : index
    %c6_66 = arith.constant 6 : index
    %65 = memref.load %arg1[%c0_65, %c6_66] : memref<2x8xi32, #tpu.memory_space<smem>>
    %66 = arith.sitofp %65 : i32 to f32
    %cst_67 = arith.constant 1.000000e+00 : f32
    %67 = arith.subf %66, %cst_67 : f32
    %cst_68 = arith.constant 1.000000e+09 : f32
    %68 = arith.mulf %67, %cst_68 : f32
    %69 = vector.broadcast %68 : f32 to vector<1x128xf32>
    %c6_69 = arith.constant 6 : index
    %c0_70 = arith.constant 0 : index
    %70 = vector.load %arg8[%c6_69, %c0_70] : memref<16x128xf32, #tpu.memory_space<vmem>>, vector<1x128xf32>
    tpu.vector_store %arg8[%c6_69, %c0_70], %69 {strides = array<i32>} : memref<16x128xf32, #tpu.memory_space<vmem>>, vector<1x128xf32>,
    %c0_71 = arith.constant 0 : index
    %c7 = arith.constant 7 : index
    %71 = memref.load %arg0[%c0_71, %c7] : memref<2x8xi32, #tpu.memory_space<smem>>
    %72 = arith.index_cast %71 : i32 to index
    %c0_72 = arith.constant 0 : index
    %73 = vector.load %arg2[%72, %c0_72] : memref<112x32xf32, #tpu.memory_space<vmem>>, vector<1x32xf32>
    %c7_73 = arith.constant 7 : index
    %c0_74 = arith.constant 0 : index
    %74 = vector.load %arg6[%c7_73, %c0_74] : memref<16x32xf32, #tpu.memory_space<vmem>>, vector<1x32xf32>
    tpu.vector_store %arg6[%c7_73, %c0_74], %73 {strides = array<i32>} : memref<16x32xf32, #tpu.memory_space<vmem>>, vector<1x32xf32>,
    %c0_75 = arith.constant 0 : index
    %c7_76 = arith.constant 7 : index
    %75 = memref.load %arg1[%c0_75, %c7_76] : memref<2x8xi32, #tpu.memory_space<smem>>
    %76 = arith.sitofp %75 : i32 to f32
    %cst_77 = arith.constant 1.000000e+00 : f32
    %77 = arith.subf %76, %cst_77 : f32
    %cst_78 = arith.constant 1.000000e+09 : f32
    %78 = arith.mulf %77, %cst_78 : f32
    %79 = vector.broadcast %78 : f32 to vector<1x128xf32>
    %c7_79 = arith.constant 7 : index
    %c0_80 = arith.constant 0 : index
    %80 = vector.load %arg8[%c7_79, %c0_80] : memref<16x128xf32, #tpu.memory_space<vmem>>, vector<1x128xf32>
    tpu.vector_store %arg8[%c7_79, %c0_80], %79 {strides = array<i32>} : memref<16x128xf32, #tpu.memory_space<vmem>>, vector<1x128xf32>,
    %c1_81 = arith.constant 1 : index
    %c0_82 = arith.constant 0 : index
    %81 = memref.load %arg0[%c1_81, %c0_82] : memref<2x8xi32, #tpu.memory_space<smem>>
    %82 = arith.index_cast %81 : i32 to index
    %c0_83 = arith.constant 0 : index
    %83 = vector.load %arg2[%82, %c0_83] : memref<112x32xf32, #tpu.memory_space<vmem>>, vector<1x32xf32>
    %c8 = arith.constant 8 : index
    %c0_84 = arith.constant 0 : index
    %84 = vector.load %arg6[%c8, %c0_84] : memref<16x32xf32, #tpu.memory_space<vmem>>, vector<1x32xf32>
    tpu.vector_store %arg6[%c8, %c0_84], %83 {strides = array<i32>} : memref<16x32xf32, #tpu.memory_space<vmem>>, vector<1x32xf32>,
    %c1_85 = arith.constant 1 : index
    %c0_86 = arith.constant 0 : index
    %85 = vector.load %arg7[%c1_85, %c0_86] : memref<2x32xf32, #tpu.memory_space<vmem>>, vector<1x32xf32>
    tpu.vector_store %arg7[%c1_85, %c0_86], %83 {strides = array<i32>} : memref<2x32xf32, #tpu.memory_space<vmem>>, vector<1x32xf32>,
    %c1_87 = arith.constant 1 : index
    %c0_88 = arith.constant 0 : index
    %86 = memref.load %arg1[%c1_87, %c0_88] : memref<2x8xi32, #tpu.memory_space<smem>>
    %87 = arith.sitofp %86 : i32 to f32
    %cst_89 = arith.constant 1.000000e+00 : f32
    %88 = arith.subf %87, %cst_89 : f32
    %cst_90 = arith.constant 1.000000e+09 : f32
    %89 = arith.mulf %88, %cst_90 : f32
    %90 = vector.broadcast %89 : f32 to vector<1x128xf32>
    %c8_91 = arith.constant 8 : index
    %c0_92 = arith.constant 0 : index
    %91 = vector.load %arg8[%c8_91, %c0_92] : memref<16x128xf32, #tpu.memory_space<vmem>>, vector<1x128xf32>
    tpu.vector_store %arg8[%c8_91, %c0_92], %90 {strides = array<i32>} : memref<16x128xf32, #tpu.memory_space<vmem>>, vector<1x128xf32>,
    %c1_93 = arith.constant 1 : index
    %c1_94 = arith.constant 1 : index
    %92 = memref.load %arg0[%c1_93, %c1_94] : memref<2x8xi32, #tpu.memory_space<smem>>
    %93 = arith.index_cast %92 : i32 to index
    %c0_95 = arith.constant 0 : index
    %94 = vector.load %arg2[%93, %c0_95] : memref<112x32xf32, #tpu.memory_space<vmem>>, vector<1x32xf32>
    %c9 = arith.constant 9 : index
    %c0_96 = arith.constant 0 : index
    %95 = vector.load %arg6[%c9, %c0_96] : memref<16x32xf32, #tpu.memory_space<vmem>>, vector<1x32xf32>
    tpu.vector_store %arg6[%c9, %c0_96], %94 {strides = array<i32>} : memref<16x32xf32, #tpu.memory_space<vmem>>, vector<1x32xf32>,
    %c1_97 = arith.constant 1 : index
    %c1_98 = arith.constant 1 : index
    %96 = memref.load %arg1[%c1_97, %c1_98] : memref<2x8xi32, #tpu.memory_space<smem>>
    %97 = arith.sitofp %96 : i32 to f32
    %cst_99 = arith.constant 1.000000e+00 : f32
    %98 = arith.subf %97, %cst_99 : f32
    %cst_100 = arith.constant 1.000000e+09 : f32
    %99 = arith.mulf %98, %cst_100 : f32
    %100 = vector.broadcast %99 : f32 to vector<1x128xf32>
    %c9_101 = arith.constant 9 : index
    %c0_102 = arith.constant 0 : index
    %101 = vector.load %arg8[%c9_101, %c0_102] : memref<16x128xf32, #tpu.memory_space<vmem>>, vector<1x128xf32>
    tpu.vector_store %arg8[%c9_101, %c0_102], %100 {strides = array<i32>} : memref<16x128xf32, #tpu.memory_space<vmem>>, vector<1x128xf32>,
    %c1_103 = arith.constant 1 : index
    %c2_104 = arith.constant 2 : index
    %102 = memref.load %arg0[%c1_103, %c2_104] : memref<2x8xi32, #tpu.memory_space<smem>>
    %103 = arith.index_cast %102 : i32 to index
    %c0_105 = arith.constant 0 : index
    %104 = vector.load %arg2[%103, %c0_105] : memref<112x32xf32, #tpu.memory_space<vmem>>, vector<1x32xf32>
    %c10 = arith.constant 10 : index
    %c0_106 = arith.constant 0 : index
    %105 = vector.load %arg6[%c10, %c0_106] : memref<16x32xf32, #tpu.memory_space<vmem>>, vector<1x32xf32>
    tpu.vector_store %arg6[%c10, %c0_106], %104 {strides = array<i32>} : memref<16x32xf32, #tpu.memory_space<vmem>>, vector<1x32xf32>,
    %c1_107 = arith.constant 1 : index
    %c2_108 = arith.constant 2 : index
    %106 = memref.load %arg1[%c1_107, %c2_108] : memref<2x8xi32, #tpu.memory_space<smem>>
    %107 = arith.sitofp %106 : i32 to f32
    %cst_109 = arith.constant 1.000000e+00 : f32
    %108 = arith.subf %107, %cst_109 : f32
    %cst_110 = arith.constant 1.000000e+09 : f32
    %109 = arith.mulf %108, %cst_110 : f32
    %110 = vector.broadcast %109 : f32 to vector<1x128xf32>
    %c10_111 = arith.constant 10 : index
    %c0_112 = arith.constant 0 : index
    %111 = vector.load %arg8[%c10_111, %c0_112] : memref<16x128xf32, #tpu.memory_space<vmem>>, vector<1x128xf32>
    tpu.vector_store %arg8[%c10_111, %c0_112], %110 {strides = array<i32>} : memref<16x128xf32, #tpu.memory_space<vmem>>, vector<1x128xf32>,
    %c1_113 = arith.constant 1 : index
    %c3_114 = arith.constant 3 : index
    %112 = memref.load %arg0[%c1_113, %c3_114] : memref<2x8xi32, #tpu.memory_space<smem>>
    %113 = arith.index_cast %112 : i32 to index
    %c0_115 = arith.constant 0 : index
    %114 = vector.load %arg2[%113, %c0_115] : memref<112x32xf32, #tpu.memory_space<vmem>>, vector<1x32xf32>
    %c11 = arith.constant 11 : index
    %c0_116 = arith.constant 0 : index
    %115 = vector.load %arg6[%c11, %c0_116] : memref<16x32xf32, #tpu.memory_space<vmem>>, vector<1x32xf32>
    tpu.vector_store %arg6[%c11, %c0_116], %114 {strides = array<i32>} : memref<16x32xf32, #tpu.memory_space<vmem>>, vector<1x32xf32>,
    %c1_117 = arith.constant 1 : index
    %c3_118 = arith.constant 3 : index
    %116 = memref.load %arg1[%c1_117, %c3_118] : memref<2x8xi32, #tpu.memory_space<smem>>
    %117 = arith.sitofp %116 : i32 to f32
    %cst_119 = arith.constant 1.000000e+00 : f32
    %118 = arith.subf %117, %cst_119 : f32
    %cst_120 = arith.constant 1.000000e+09 : f32
    %119 = arith.mulf %118, %cst_120 : f32
    %120 = vector.broadcast %119 : f32 to vector<1x128xf32>
    %c11_121 = arith.constant 11 : index
    %c0_122 = arith.constant 0 : index
    %121 = vector.load %arg8[%c11_121, %c0_122] : memref<16x128xf32, #tpu.memory_space<vmem>>, vector<1x128xf32>
    tpu.vector_store %arg8[%c11_121, %c0_122], %120 {strides = array<i32>} : memref<16x128xf32, #tpu.memory_space<vmem>>, vector<1x128xf32>,
    %c1_123 = arith.constant 1 : index
    %c4_124 = arith.constant 4 : index
    %122 = memref.load %arg0[%c1_123, %c4_124] : memref<2x8xi32, #tpu.memory_space<smem>>
    %123 = arith.index_cast %122 : i32 to index
    %c0_125 = arith.constant 0 : index
    %124 = vector.load %arg2[%123, %c0_125] : memref<112x32xf32, #tpu.memory_space<vmem>>, vector<1x32xf32>
    %c12 = arith.constant 12 : index
    %c0_126 = arith.constant 0 : index
    %125 = vector.load %arg6[%c12, %c0_126] : memref<16x32xf32, #tpu.memory_space<vmem>>, vector<1x32xf32>
    tpu.vector_store %arg6[%c12, %c0_126], %124 {strides = array<i32>} : memref<16x32xf32, #tpu.memory_space<vmem>>, vector<1x32xf32>,
    %c1_127 = arith.constant 1 : index
    %c4_128 = arith.constant 4 : index
    %126 = memref.load %arg1[%c1_127, %c4_128] : memref<2x8xi32, #tpu.memory_space<smem>>
    %127 = arith.sitofp %126 : i32 to f32
    %cst_129 = arith.constant 1.000000e+00 : f32
    %128 = arith.subf %127, %cst_129 : f32
    %cst_130 = arith.constant 1.000000e+09 : f32
    %129 = arith.mulf %128, %cst_130 : f32
    %130 = vector.broadcast %129 : f32 to vector<1x128xf32>
    %c12_131 = arith.constant 12 : index
    %c0_132 = arith.constant 0 : index
    %131 = vector.load %arg8[%c12_131, %c0_132] : memref<16x128xf32, #tpu.memory_space<vmem>>, vector<1x128xf32>
    tpu.vector_store %arg8[%c12_131, %c0_132], %130 {strides = array<i32>} : memref<16x128xf32, #tpu.memory_space<vmem>>, vector<1x128xf32>,
    %c1_133 = arith.constant 1 : index
    %c5_134 = arith.constant 5 : index
    %132 = memref.load %arg0[%c1_133, %c5_134] : memref<2x8xi32, #tpu.memory_space<smem>>
    %133 = arith.index_cast %132 : i32 to index
    %c0_135 = arith.constant 0 : index
    %134 = vector.load %arg2[%133, %c0_135] : memref<112x32xf32, #tpu.memory_space<vmem>>, vector<1x32xf32>
    %c13 = arith.constant 13 : index
    %c0_136 = arith.constant 0 : index
    %135 = vector.load %arg6[%c13, %c0_136] : memref<16x32xf32, #tpu.memory_space<vmem>>, vector<1x32xf32>
    tpu.vector_store %arg6[%c13, %c0_136], %134 {strides = array<i32>} : memref<16x32xf32, #tpu.memory_space<vmem>>, vector<1x32xf32>,
    %c1_137 = arith.constant 1 : index
    %c5_138 = arith.constant 5 : index
    %136 = memref.load %arg1[%c1_137, %c5_138] : memref<2x8xi32, #tpu.memory_space<smem>>
    %137 = arith.sitofp %136 : i32 to f32
    %cst_139 = arith.constant 1.000000e+00 : f32
    %138 = arith.subf %137, %cst_139 : f32
    %cst_140 = arith.constant 1.000000e+09 : f32
    %139 = arith.mulf %138, %cst_140 : f32
    %140 = vector.broadcast %139 : f32 to vector<1x128xf32>
    %c13_141 = arith.constant 13 : index
    %c0_142 = arith.constant 0 : index
    %141 = vector.load %arg8[%c13_141, %c0_142] : memref<16x128xf32, #tpu.memory_space<vmem>>, vector<1x128xf32>
    tpu.vector_store %arg8[%c13_141, %c0_142], %140 {strides = array<i32>} : memref<16x128xf32, #tpu.memory_space<vmem>>, vector<1x128xf32>,
    %c1_143 = arith.constant 1 : index
    %c6_144 = arith.constant 6 : index
    %142 = memref.load %arg0[%c1_143, %c6_144] : memref<2x8xi32, #tpu.memory_space<smem>>
    %143 = arith.index_cast %142 : i32 to index
    %c0_145 = arith.constant 0 : index
    %144 = vector.load %arg2[%143, %c0_145] : memref<112x32xf32, #tpu.memory_space<vmem>>, vector<1x32xf32>
    %c14 = arith.constant 14 : index
    %c0_146 = arith.constant 0 : index
    %145 = vector.load %arg6[%c14, %c0_146] : memref<16x32xf32, #tpu.memory_space<vmem>>, vector<1x32xf32>
    tpu.vector_store %arg6[%c14, %c0_146], %144 {strides = array<i32>} : memref<16x32xf32, #tpu.memory_space<vmem>>, vector<1x32xf32>,
    %c1_147 = arith.constant 1 : index
    %c6_148 = arith.constant 6 : index
    %146 = memref.load %arg1[%c1_147, %c6_148] : memref<2x8xi32, #tpu.memory_space<smem>>
    %147 = arith.sitofp %146 : i32 to f32
    %cst_149 = arith.constant 1.000000e+00 : f32
    %148 = arith.subf %147, %cst_149 : f32
    %cst_150 = arith.constant 1.000000e+09 : f32
    %149 = arith.mulf %148, %cst_150 : f32
    %150 = vector.broadcast %149 : f32 to vector<1x128xf32>
    %c14_151 = arith.constant 14 : index
    %c0_152 = arith.constant 0 : index
    %151 = vector.load %arg8[%c14_151, %c0_152] : memref<16x128xf32, #tpu.memory_space<vmem>>, vector<1x128xf32>
    tpu.vector_store %arg8[%c14_151, %c0_152], %150 {strides = array<i32>} : memref<16x128xf32, #tpu.memory_space<vmem>>, vector<1x128xf32>,
    %c1_153 = arith.constant 1 : index
    %c7_154 = arith.constant 7 : index
    %152 = memref.load %arg0[%c1_153, %c7_154] : memref<2x8xi32, #tpu.memory_space<smem>>
    %153 = arith.index_cast %152 : i32 to index
    %c0_155 = arith.constant 0 : index
    %154 = vector.load %arg2[%153, %c0_155] : memref<112x32xf32, #tpu.memory_space<vmem>>, vector<1x32xf32>
    %c15 = arith.constant 15 : index
    %c0_156 = arith.constant 0 : index
    %155 = vector.load %arg6[%c15, %c0_156] : memref<16x32xf32, #tpu.memory_space<vmem>>, vector<1x32xf32>
    tpu.vector_store %arg6[%c15, %c0_156], %154 {strides = array<i32>} : memref<16x32xf32, #tpu.memory_space<vmem>>, vector<1x32xf32>,
    %c1_157 = arith.constant 1 : index
    %c7_158 = arith.constant 7 : index
    %156 = memref.load %arg1[%c1_157, %c7_158] : memref<2x8xi32, #tpu.memory_space<smem>>
    %157 = arith.sitofp %156 : i32 to f32
    %cst_159 = arith.constant 1.000000e+00 : f32
    %158 = arith.subf %157, %cst_159 : f32
    %cst_160 = arith.constant 1.000000e+09 : f32
    %159 = arith.mulf %158, %cst_160 : f32
    %160 = vector.broadcast %159 : f32 to vector<1x128xf32>
    %c15_161 = arith.constant 15 : index
    %c0_162 = arith.constant 0 : index
    %161 = vector.load %arg8[%c15_161, %c0_162] : memref<16x128xf32, #tpu.memory_space<vmem>>, vector<1x128xf32>
    tpu.vector_store %arg8[%c15_161, %c0_162], %160 {strides = array<i32>} : memref<16x128xf32, #tpu.memory_space<vmem>>, vector<1x128xf32>,
    %c104 = arith.constant 104 : index
    %c0_163 = arith.constant 0 : index
    %162 = vector.load %arg2[%c104, %c0_163] : memref<112x32xf32, #tpu.memory_space<vmem>>, vector<8x32xf32>
    %c0_164 = arith.constant 0 : index
    %c0_165 = arith.constant 0 : index
    %163 = vector.load %arg6[%c0_164, %c0_165] : memref<16x32xf32, #tpu.memory_space<vmem>>, vector<16x32xf32>
    %164 = tpu.concatenate %162, %162 in 0 : vector<8x32xf32>, vector<8x32xf32> -> vector<16x32xf32>
    %165 = arith.addf %163, %164 : vector<16x32xf32>
    %c0_166 = arith.constant 0 : index
    %c0_167 = arith.constant 0 : index
    %166 = vector.load %arg7[%c0_166, %c0_167] : memref<2x32xf32, #tpu.memory_space<vmem>>, vector<2x32xf32>
    %167 = vector.extract_strided_slice %162 {offsets = [0, 0], sizes = [1, 32], strides = [1, 1]} : vector<8x32xf32> to vector<1x32xf32>
    %168 = vector.broadcast %167 : vector<1x32xf32> to vector<2x32xf32>
    %169 = arith.addf %166, %168 : vector<2x32xf32>
    %c0_168 = arith.constant 0 : index
    %c0_169 = arith.constant 0 : index
    %170 = vector.load %arg8[%c0_168, %c0_169] : memref<16x128xf32, #tpu.memory_space<vmem>>, vector<16x128xf32>
    %c0_170 = arith.constant 0 : index
    %c0_171 = arith.constant 0 : index
    %171 = vector.load %arg3[%c0_170, %c0_171] : memref<384x32xf32, #tpu.memory_space<vmem>>, vector<32x32xf32>
    %c32 = arith.constant 32 : index
    %c0_172 = arith.constant 0 : index
    %172 = vector.load %arg3[%c32, %c0_172] : memref<384x32xf32, #tpu.memory_space<vmem>>, vector<32x32xf32>
    %c64 = arith.constant 64 : index
    %c0_173 = arith.constant 0 : index
    %173 = vector.load %arg3[%c64, %c0_173] : memref<384x32xf32, #tpu.memory_space<vmem>>, vector<32x32xf32>
    %c96 = arith.constant 96 : index
    %c0_174 = arith.constant 0 : index
    %174 = vector.load %arg3[%c96, %c0_174] : memref<384x32xf32, #tpu.memory_space<vmem>>, vector<32x32xf32>
    %c128 = arith.constant 128 : index
    %c0_175 = arith.constant 0 : index
    %175 = vector.load %arg3[%c128, %c0_175] : memref<384x32xf32, #tpu.memory_space<vmem>>, vector<128x32xf32>
    %c256 = arith.constant 256 : index
    %c0_176 = arith.constant 0 : index
    %176 = vector.load %arg3[%c256, %c0_176] : memref<384x32xf32, #tpu.memory_space<vmem>>, vector<128x32xf32>
    %c0_177 = arith.constant 0 : index
    %c0_178 = arith.constant 0 : index
    %177 = vector.load %arg4[%c0_177, %c0_178] : memref<112x128xf32, #tpu.memory_space<vmem>>, vector<32x128xf32>
    %c32_179 = arith.constant 32 : index
    %c0_180 = arith.constant 0 : index
    %178 = vector.load %arg4[%c32_179, %c0_180] : memref<112x128xf32, #tpu.memory_space<vmem>>, vector<32x128xf32>
    %c64_181 = arith.constant 64 : index
    %c0_182 = arith.constant 0 : index
    %179 = vector.load %arg4[%c64_181, %c0_182] : memref<112x128xf32, #tpu.memory_space<vmem>>, vector<32x128xf32>
    %c96_183 = arith.constant 96 : index
    %c0_184 = arith.constant 0 : index
    %180 = vector.load %arg4[%c96_183, %c0_184] : memref<112x128xf32, #tpu.memory_space<vmem>>, vector<16x128xf32>
    %cst_185 = arith.constant dense<0.000000e+00> : vector<2x32xf32>
    %181 = tpu.matmul %169, %171, %cst_185 {dimension_numbers = #tpu.dot_dimension_numbers<[1], [0], [0], [1], [0, 0, 1, 1], [], []>} : vector<2x32xf32>, vector<32x32xf32>, vector<2x32xf32> -> vector<2x32xf32>
    %182 = vector.extract_strided_slice %180 {offsets = [0, 0], sizes = [1, 32], strides = [1, 1]} : vector<16x128xf32> to vector<1x32xf32>
    %183 = vector.broadcast %182 : vector<1x32xf32> to vector<2x32xf32>
    %184 = arith.addf %181, %183 : vector<2x32xf32>
    %cst_186 = arith.constant dense<0.000000e+00> : vector<16x32xf32>
    %185 = tpu.matmul %165, %172, %cst_186 {dimension_numbers = #tpu.dot_dimension_numbers<[1], [0], [0], [1], [0, 0, 1, 1], [], []>} : vector<16x32xf32>, vector<32x32xf32>, vector<16x32xf32> -> vector<16x32xf32>
    %186 = vector.extract_strided_slice %180 {offsets = [1, 0], sizes = [1, 32], strides = [1, 1]} : vector<16x128xf32> to vector<1x32xf32>
    %187 = vector.broadcast %186 : vector<1x32xf32> to vector<16x32xf32>
    %188 = arith.addf %185, %187 : vector<16x32xf32>
    %cst_187 = arith.constant dense<0.000000e+00> : vector<16x32xf32>
    %189 = tpu.matmul %165, %173, %cst_187 {dimension_numbers = #tpu.dot_dimension_numbers<[1], [0], [0], [1], [0, 0, 1, 1], [], []>} : vector<16x32xf32>, vector<32x32xf32>, vector<16x32xf32> -> vector<16x32xf32>
    %190 = vector.extract_strided_slice %180 {offsets = [2, 0], sizes = [1, 32], strides = [1, 1]} : vector<16x128xf32> to vector<1x32xf32>
    %191 = vector.broadcast %190 : vector<1x32xf32> to vector<16x32xf32>
    %192 = arith.addf %189, %191 : vector<16x32xf32>
    %193 = vector.shape_cast %184 : vector<2x32xf32> to vector<2x1x32xf32>
    %194 = vector.shape_cast %188 : vector<16x32xf32> to vector<2x8x32xf32>
    %195 = vector.broadcast %193 : vector<2x1x32xf32> to vector<2x8x32xf32>
    %196 = arith.mulf %195, %194 : vector<2x8x32xf32>
    %197 = vector.shape_cast %196 : vector<2x8x32xf32> to vector<16x32xf32>
    %cst_188 = arith.constant dense<0.000000e+00> : vector<16x128xf32>
    %198 = tpu.matmul %197, %179, %cst_188 {dimension_numbers = #tpu.dot_dimension_numbers<[1], [0], [0], [1], [0, 0, 1, 1], [], []>} : vector<16x32xf32>, vector<32x128xf32>, vector<16x128xf32> -> vector<16x128xf32>
    %199 = arith.addf %198, %170 : vector<16x128xf32>
    %200 = vector.shape_cast %199 : vector<16x128xf32> to vector<2x8x128xf32>
    %cst_189 = arith.constant dense<0xFF800000> : vector<2x128xf32>
    %201 = vector.multi_reduction <maximumf>, %200, %cst_189 [1] : vector<2x8x128xf32> to vector<2x128xf32>
    %202 = vector.shape_cast %201 : vector<2x128xf32> to vector<2x1x128xf32>
    %203 = vector.broadcast %202 : vector<2x1x128xf32> to vector<2x8x128xf32>
    %204 = arith.subf %200, %203 : vector<2x8x128xf32>
    %205 = math.exp %204 : vector<2x8x128xf32>
    %cst_190 = arith.constant dense<0.000000e+00> : vector<2x128xf32>
    %206 = vector.multi_reduction <add>, %205, %cst_190 [1] : vector<2x8x128xf32> to vector<2x128xf32>
    %207 = vector.shape_cast %206 : vector<2x128xf32> to vector<2x1x128xf32>
    %208 = vector.broadcast %207 : vector<2x1x128xf32> to vector<2x8x128xf32>
    %209 = arith.divf %205, %208 : vector<2x8x128xf32>
    %210 = vector.shape_cast %209 : vector<2x8x128xf32> to vector<16x128xf32>
    %cst_191 = arith.constant dense<0.000000e+00> : vector<16x32xf32>
    %211 = tpu.matmul %210, %176, %cst_191 {dimension_numbers = #tpu.dot_dimension_numbers<[1], [0], [0], [1], [0, 0, 1, 1], [], []>} : vector<16x128xf32>, vector<128x32xf32>, vector<16x32xf32> -> vector<16x32xf32>
    %212 = arith.mulf %211, %192 : vector<16x32xf32>
    %213 = vector.shape_cast %212 : vector<16x32xf32> to vector<2x8x32xf32>
    %cst_192 = arith.constant dense<0.000000e+00> : vector<2x32xf32>
    %214 = vector.multi_reduction <add>, %213, %cst_192 [1] : vector<2x8x32xf32> to vector<2x32xf32>
    %cst_193 = arith.constant dense<0.000000e+00> : vector<2x32xf32>
    %215 = tpu.matmul %214, %174, %cst_193 {dimension_numbers = #tpu.dot_dimension_numbers<[1], [0], [0], [1], [0, 0, 1, 1], [], []>} : vector<2x32xf32>, vector<32x32xf32>, vector<2x32xf32> -> vector<2x32xf32>
    %216 = vector.extract_strided_slice %180 {offsets = [3, 0], sizes = [1, 32], strides = [1, 1]} : vector<16x128xf32> to vector<1x32xf32>
    %217 = vector.broadcast %216 : vector<1x32xf32> to vector<2x32xf32>
    %218 = arith.addf %215, %217 : vector<2x32xf32>
    %219 = arith.addf %169, %218 : vector<2x32xf32>
    %220 = vector.extract_strided_slice %180 {offsets = [4, 0], sizes = [1, 32], strides = [1, 1]} : vector<16x128xf32> to vector<1x32xf32>
    %221 = vector.extract_strided_slice %180 {offsets = [5, 0], sizes = [1, 32], strides = [1, 1]} : vector<16x128xf32> to vector<1x32xf32>
    %cst_194 = arith.constant dense<0.000000e+00> : vector<2xf32>
    %222 = vector.multi_reduction <add>, %219, %cst_194 [1] : vector<2x32xf32> to vector<2xf32>
    %223 = vector.shape_cast %222 : vector<2xf32> to vector<2x1xf32>
    %cst_195 = arith.constant 3.200000e+01 : f32
    %224 = vector.broadcast %cst_195 : f32 to vector<2x1xf32>
    %225 = arith.divf %223, %224 : vector<2x1xf32>
    %226 = vector.broadcast %225 : vector<2x1xf32> to vector<2x32xf32>
    %227 = arith.subf %219, %226 : vector<2x32xf32>
    %228 = arith.mulf %227, %227 : vector<2x32xf32>
    %cst_196 = arith.constant dense<0.000000e+00> : vector<2xf32>
    %229 = vector.multi_reduction <add>, %228, %cst_196 [1] : vector<2x32xf32> to vector<2xf32>
    %230 = vector.shape_cast %229 : vector<2xf32> to vector<2x1xf32>
    %cst_197 = arith.constant 3.200000e+01 : f32
    %231 = vector.broadcast %cst_197 : f32 to vector<2x1xf32>
    %232 = arith.divf %230, %231 : vector<2x1xf32>
    %233 = vector.broadcast %225 : vector<2x1xf32> to vector<2x32xf32>
    %234 = arith.subf %219, %233 : vector<2x32xf32>
    %cst_198 = arith.constant 9.99999996E-13 : f32
    %235 = vector.broadcast %cst_198 : f32 to vector<2x1xf32>
    %236 = arith.addf %232, %235 : vector<2x1xf32>
    %237 = math.rsqrt %236 : vector<2x1xf32>
    %238 = vector.broadcast %237 : vector<2x1xf32> to vector<2x32xf32>
    %239 = arith.mulf %234, %238 : vector<2x32xf32>
    %240 = vector.broadcast %220 : vector<1x32xf32> to vector<2x32xf32>
    %241 = arith.mulf %239, %240 : vector<2x32xf32>
    %242 = vector.broadcast %221 : vector<1x32xf32> to vector<2x32xf32>
    %243 = arith.addf %241, %242 : vector<2x32xf32>
    %cst_199 = arith.constant dense<0.000000e+00> : vector<2x128xf32>
    %244 = tpu.matmul %243, %177, %cst_199 {dimension_numbers = #tpu.dot_dimension_numbers<[1], [0], [0], [1], [0, 0, 1, 1], [], []>} : vector<2x32xf32>, vector<32x128xf32>, vector<2x128xf32> -> vector<2x128xf32>
    %245 = vector.extract_strided_slice %180 {offsets = [9, 0], sizes = [1, 128], strides = [1, 1]} : vector<16x128xf32> to vector<1x128xf32>
    %246 = vector.broadcast %245 : vector<1x128xf32> to vector<2x128xf32>
    %247 = arith.addf %244, %246 : vector<2x128xf32>
    %248 = arith.mulf %247, %247 : vector<2x128xf32>
    %249 = arith.mulf %247, %248 : vector<2x128xf32>
    %cst_200 = arith.constant 4.471500e-02 : f32
    %250 = vector.broadcast %cst_200 : f32 to vector<2x128xf32>
    %251 = arith.mulf %250, %249 : vector<2x128xf32>
    %252 = arith.addf %247, %251 : vector<2x128xf32>
    %cst_201 = arith.constant 0.797884583 : f32
    %253 = vector.broadcast %cst_201 : f32 to vector<2x128xf32>
    %254 = arith.mulf %253, %252 : vector<2x128xf32>
    %255 = math.tanh %254 : vector<2x128xf32>
    %cst_202 = arith.constant 1.000000e+00 : f32
    %256 = vector.broadcast %cst_202 : f32 to vector<2x128xf32>
    %257 = arith.addf %256, %255 : vector<2x128xf32>
    %cst_203 = arith.constant 5.000000e-01 : f32
    %258 = vector.broadcast %cst_203 : f32 to vector<2x128xf32>
    %259 = arith.mulf %258, %257 : vector<2x128xf32>
    %260 = arith.mulf %247, %259 : vector<2x128xf32>
    %cst_204 = arith.constant dense<0.000000e+00> : vector<2x32xf32>
    %261 = tpu.matmul %260, %175, %cst_204 {dimension_numbers = #tpu.dot_dimension_numbers<[1], [0], [0], [1], [0, 0, 1, 1], [], []>} : vector<2x128xf32>, vector<128x32xf32>, vector<2x32xf32> -> vector<2x32xf32>
    %262 = vector.extract_strided_slice %180 {offsets = [6, 0], sizes = [1, 32], strides = [1, 1]} : vector<16x128xf32> to vector<1x32xf32>
    %263 = vector.broadcast %262 : vector<1x32xf32> to vector<2x32xf32>
    %264 = arith.addf %261, %263 : vector<2x32xf32>
    %265 = arith.addf %243, %264 : vector<2x32xf32>
    %266 = vector.extract_strided_slice %180 {offsets = [7, 0], sizes = [1, 32], strides = [1, 1]} : vector<16x128xf32> to vector<1x32xf32>
    %267 = vector.extract_strided_slice %180 {offsets = [8, 0], sizes = [1, 32], strides = [1, 1]} : vector<16x128xf32> to vector<1x32xf32>
    %cst_205 = arith.constant dense<0.000000e+00> : vector<2xf32>
    %268 = vector.multi_reduction <add>, %265, %cst_205 [1] : vector<2x32xf32> to vector<2xf32>
    %269 = vector.shape_cast %268 : vector<2xf32> to vector<2x1xf32>
    %cst_206 = arith.constant 3.200000e+01 : f32
    %270 = vector.broadcast %cst_206 : f32 to vector<2x1xf32>
    %271 = arith.divf %269, %270 : vector<2x1xf32>
    %272 = vector.broadcast %271 : vector<2x1xf32> to vector<2x32xf32>
    %273 = arith.subf %265, %272 : vector<2x32xf32>
    %274 = arith.mulf %273, %273 : vector<2x32xf32>
    %cst_207 = arith.constant dense<0.000000e+00> : vector<2xf32>
    %275 = vector.multi_reduction <add>, %274, %cst_207 [1] : vector<2x32xf32> to vector<2xf32>
    %276 = vector.shape_cast %275 : vector<2xf32> to vector<2x1xf32>
    %cst_208 = arith.constant 3.200000e+01 : f32
    %277 = vector.broadcast %cst_208 : f32 to vector<2x1xf32>
    %278 = arith.divf %276, %277 : vector<2x1xf32>
    %279 = vector.broadcast %271 : vector<2x1xf32> to vector<2x32xf32>
    %280 = arith.subf %265, %279 : vector<2x32xf32>
    %cst_209 = arith.constant 9.99999996E-13 : f32
    %281 = vector.broadcast %cst_209 : f32 to vector<2x1xf32>
    %282 = arith.addf %278, %281 : vector<2x1xf32>
    %283 = math.rsqrt %282 : vector<2x1xf32>
    %284 = vector.broadcast %283 : vector<2x1xf32> to vector<2x32xf32>
    %285 = arith.mulf %280, %284 : vector<2x32xf32>
    %286 = vector.broadcast %266 : vector<1x32xf32> to vector<2x32xf32>
    %287 = arith.mulf %285, %286 : vector<2x32xf32>
    %288 = vector.broadcast %267 : vector<1x32xf32> to vector<2x32xf32>
    %289 = arith.addf %287, %288 : vector<2x32xf32>
    %cst_210 = arith.constant dense<0.000000e+00> : vector<2x128xf32>
    %290 = tpu.matmul %289, %178, %cst_210 {dimension_numbers = #tpu.dot_dimension_numbers<[1], [0], [0], [1], [0, 0, 1, 1], [], []>} : vector<2x32xf32>, vector<32x128xf32>, vector<2x128xf32> -> vector<2x128xf32>
    %291 = vector.extract_strided_slice %180 {offsets = [10, 0], sizes = [1, 128], strides = [1, 1]} : vector<16x128xf32> to vector<1x128xf32>
    %292 = vector.broadcast %291 : vector<1x128xf32> to vector<2x128xf32>
    %293 = arith.addf %290, %292 : vector<2x128xf32>
    %294 = vector.extract_strided_slice %293 {offsets = [0, 0], sizes = [2, 4], strides = [1, 1]} : vector<2x128xf32> to vector<2x4xf32>
    %c0_211 = arith.constant 0 : index
    %c0_212 = arith.constant 0 : index
    %295 = vector.load %arg5[%c0_211, %c0_212] : memref<2x4xf32, #tpu.memory_space<vmem>>, vector<2x4xf32>
    tpu.vector_store %arg5[%c0_211, %c0_212], %294 {strides = array<i32>} : memref<2x4xf32, #tpu.memory_space<vmem>>, vector<2x4xf32>,
    return
  }
}

</mosaic_0001>

<llo_original>
// kernel: base_model_forward.1
$region0: #{base_model_forward.1}
  #allocation0 [shape = 'u32[]', space=smem, size = 0x4, offset = 0x4, fixed_abs, tag = 'smem constant byte address 0x4 - core index']
  #allocation1 [shape = 'u32[144,128]{1,0:T(1,128)}', space=vmem, size = 0x12000, scoped, tag = 'internal scratch']
  #allocation2 [shape = 'f32[16,32]{1,0:T(8,128)}', space=vmem, size = 0x2000, scoped, tag = 'scratch operand']
  #allocation3 [shape = 'f32[2,32]{1,0:T(2,128)}', space=vmem, size = 0x400, scoped, tag = 'scratch operand']
  #allocation4 [shape = 'f32[16,128]{1,0:T(8,128)}', space=vmem, size = 0x2000, scoped, tag = 'scratch operand']
  %s0 = inlined_call_operand.vmem [shape: s32[2,8], index: 0, kind: input, shape index: {}]
  %s1 = inlined_call_operand.vmem [shape: s32[2,8], index: 1, kind: input, shape index: {}]
  %s2 = inlined_call_operand.vmem [shape: f32[112,32], index: 2, kind: input, shape index: {}]
  %s3 = inlined_call_operand.vmem [shape: f32[384,32], index: 3, kind: input, shape index: {}]
  %s4 = inlined_call_operand.vmem [shape: f32[112,128], index: 4, kind: input, shape index: {}]
  %s5 = inlined_call_operand.hbm [shape: f32[2,4], index: 5, kind: output, shape index: {}]
  %s6 = sld [smem:[#allocation0]]
  $region38: #{base_model_forward.1} parent=0
    _
  %s8 = ssub.s32 1, %s6
  %s9 = scalar_select 0, %s8, %s6
  $region1: #{base_model_forward.1} parent=0
    #allocation5 [shape = 'u8[1024]{0}', space=smem, size = 0x400, scoped, tag = 'input window, operand 0, single buffered']
    #allocation6 [shape = 's32[1]{0}', space=sflag, size = 0x4, scoped, tag = 'scoped memory for base_model_forward.1']
    #allocation7 [shape = 's32[1]{0}', space=sflag, size = 0x4, scoped, tag = 'scoped memory for base_model_forward.1']
    #allocation8 [shape = 'u8[1024]{0}', space=smem, size = 0x400, scoped, tag = 'input window, operand 1, single buffered']
    #allocation9 [shape = 's32[1]{0}', space=sflag, size = 0x4, scoped, tag = 'scoped memory for base_model_forward.1']
    #allocation10 [shape = 'u8[1024]{0}', space=vmem, size = 0x400, scoped, tag = 'output window, operand 0, single buffered']
    %10 = vsyncpa [#allocation7], 0
    %11 = vsyncpa [#allocation9], 0
    %12 = vsyncpa [#allocation6], 0
    // Predicated region
    $region2: #{base_model_forward.1} parent=1 // pred_check
      _
    $region3: #{base_model_forward.1} parent=1 // pred_check_branch
      %14 = sbr.rel (0) target = $region5
    $region4: #{base_model_forward.1} parent=1 // pred_region
      %s16 = ssub.s32 32, 32
      %17 = vsyncadd [#allocation7], %s16
      %s19 = sshll.u32 %s0, 4
      %s20 = int_to_ptr.vmem [resolvable:$true] %s19
      %22 = dma.vmem_to_smem %s20, 32, [#allocation5], [#allocation7]
    $region5: #{base_model_forward.1} parent=1 // pred_fallthru
      _
    // Predicated region
    $region6: #{base_model_forward.1} parent=1 // pred_check
      _
    $region7: #{base_model_forward.1} parent=1 // pred_check_branch
      %24 = sbr.rel (0) target = $region9
    $region8: #{base_model_forward.1} parent=1 // pred_region
      %s26 = ssub.s32 32, 32
      %27 = vsyncadd [#allocation9], %s26
      %s29 = sshll.u32 %s1, 4
      %s30 = int_to_ptr.vmem [resolvable:$true] %s29
      %32 = dma.vmem_to_smem %s30, 32, [#allocation8], [#allocation9]
    $region9: #{base_model_forward.1} parent=1 // pred_fallthru
      _
    // Predicated region
    $region10: #{base_model_forward.1} parent=1 // pred_check
      _
    $region11: #{base_model_forward.1} parent=1 // pred_check_branch
      %34 = sbr.rel (0) target = $region13
    $region12: #{base_model_forward.1} parent=1 // pred_region
      _
    $region13: #{base_model_forward.1} parent=1 // pred_fallthru
      _
    // Predicated region
    $region14: #{base_model_forward.1} parent=1 // pred_check
      _
    $region15: #{base_model_forward.1} parent=1 // pred_check_branch
      %36 = sbr.rel (0) target = $region17
    $region16: #{base_model_forward.1} parent=1 // pred_region
      _
    $region17: #{base_model_forward.1} parent=1 // pred_fallthru
      _
    // Predicated region
    $region18: #{base_model_forward.1} parent=1 // pred_check
      _
    $region19: #{base_model_forward.1} parent=1 // pred_check_branch
      %38 = sbr.rel (0) target = $region21
    $region20: #{base_model_forward.1} parent=1 // pred_region
      _
    $region21: #{base_model_forward.1} parent=1 // pred_fallthru
      _
    // Predicated region
    $region22: #{base_model_forward.1} parent=1 // pred_check
      _
    $region23: #{base_model_forward.1} parent=1 // pred_check_branch
      %40 = sbr.rel (0) target = $region25
    $region24: #{base_model_forward.1} parent=1 // pred_region
      %41 = dma.done [#allocation7], 32
    $region25: #{base_model_forward.1} parent=1 // pred_fallthru
      _
    // Predicated region
    $region26: #{base_model_forward.1} parent=1 // pred_check
      _
    $region27: #{base_model_forward.1} parent=1 // pred_check_branch
      %43 = sbr.rel (0) target = $region29
    $region28: #{base_model_forward.1} parent=1 // pred_region
      %44 = dma.done [#allocation9], 32
    $region29: #{base_model_forward.1} parent=1 // pred_fallthru
      _
    %45 = sfence
    %s46 = sld [smem:[#allocation5]]
    %s47 = scalar_lea.vmem %s2, %s46
    %v48 = vld [vmem:[%s47] sm:$0x1]
    %vm49 = vcmask 253952
    %50 = vst.msk [vmem:[#allocation2] sm:$0x1] %vm49, %v48
    %51 = vst.msk [vmem:[#allocation3] sm:$0x1] %vm49, %v48
    %s52 = sld [smem:[#allocation8]]
    %s53 = scvt.s32.f32 %s52
    %s54 = ssub.f32 %s53, 1.0
    %s55 = smul.f32 %s54, 1e+09
    %v56 = vstv %s55
    %57 = vst [vmem:[#allocation4] sm:$0x1] %v56
    %s58 = sld [smem:[#allocation5 + $0x1]]
    %s59 = scalar_lea.vmem %s2, %s58
    %v60 = vld [vmem:[%s59] sm:$0x1]
    %61 = vst.msk [vmem:[#allocation2 + $0x1] sm:$0x1] %vm49, %v60
    %s62 = sld [smem:[#allocation8 + $0x1]]
    %s63 = scvt.s32.f32 %s62
    %s64 = ssub.f32 %s63, 1.0
    %s65 = smul.f32 %s64, 1e+09
    %v66 = vstv %s65
    %67 = vst [vmem:[#allocation4 + $0x1] sm:$0x1] %v66
    %s68 = sld [smem:[#allocation5 + $0x2]]
    %s69 = scalar_lea.vmem %s2, %s68
    %v70 = vld [vmem:[%s69] sm:$0x1]
    %71 = vst.msk [vmem:[#allocation2 + $0x2] sm:$0x1] %vm49, %v70
    %s72 = sld [smem:[#allocation8 + $0x2]]
    %s73 = scvt.s32.f32 %s72
    %s74 = ssub.f32 %s73, 1.0
    %s75 = smul.f32 %s74, 1e+09
    %v76 = vstv %s75
    %77 = vst [vmem:[#allocation4 + $0x2] sm:$0x1] %v76
    %s78 = sld [smem:[#allocation5 + $0x3]]
    %s79 = scalar_lea.vmem %s2, %s78
    %v80 = vld [vmem:[%s79] sm:$0x1]
    %81 = vst.msk [vmem:[#allocation2 + $0x3] sm:$0x1] %vm49, %v80
    %s82 = sld [smem:[#allocation8 + $0x3]]
    %s83 = scvt.s32.f32 %s82
    %s84 = ssub.f32 %s83, 1.0
    %s85 = smul.f32 %s84, 1e+09
    %v86 = vstv %s85
    %87 = vst [vmem:[#allocation4 + $0x3] sm:$0x1] %v86
    %s88 = sld [smem:[#allocation5 + $0x4]]
    %s89 = scalar_lea.vmem %s2, %s88
    %v90 = vld [vmem:[%s89] sm:$0x1]
    %91 = vst.msk [vmem:[#allocation2 + $0x4] sm:$0x1] %vm49, %v90
    %s92 = sld [smem:[#allocation8 + $0x4]]
    %s93 = scvt.s32.f32 %s92
    %s94 = ssub.f32 %s93, 1.0
    %s95 = smul.f32 %s94, 1e+09
    %v96 = vstv %s95
    %97 = vst [vmem:[#allocation4 + $0x4] sm:$0x1] %v96
    %s98 = sld [smem:[#allocation5 + $0x5]]
    %s99 = scalar_lea.vmem %s2, %s98
    %v100 = vld [vmem:[%s99] sm:$0x1]
    %101 = vst.msk [vmem:[#allocation2 + $0x5] sm:$0x1] %vm49, %v100
    %s102 = sld [smem:[#allocation8 + $0x5]]
    %s103 = scvt.s32.f32 %s102
    %s104 = ssub.f32 %s103, 1.0
    %s105 = smul.f32 %s104, 1e+09
    %v106 = vstv %s105
    %107 = vst [vmem:[#allocation4 + $0x5] sm:$0x1] %v106
    %s108 = sld [smem:[#allocation5 + $0x6]]
    %s109 = scalar_lea.vmem %s2, %s108
    %v110 = vld [vmem:[%s109] sm:$0x1]
    %111 = vst.msk [vmem:[#allocation2 + $0x6] sm:$0x1] %vm49, %v110
    %s112 = sld [smem:[#allocation8 + $0x6]]
    %s113 = scvt.s32.f32 %s112
    %s114 = ssub.f32 %s113, 1.0
    %s115 = smul.f32 %s114, 1e+09
    %v116 = vstv %s115
    %117 = vst [vmem:[#allocation4 + $0x6] sm:$0x1] %v116
    %s118 = sld [smem:[#allocation5 + $0x7]]
    %s119 = scalar_lea.vmem %s2, %s118
    %v120 = vld [vmem:[%s119] sm:$0x1]
    %121 = vst.msk [vmem:[#allocation2 + $0x7] sm:$0x1] %vm49, %v120
    %s122 = sld [smem:[#allocation8 + $0x7]]
    %s123 = scvt.s32.f32 %s122
    %s124 = ssub.f32 %s123, 1.0
    %s125 = smul.f32 %s124, 1e+09
    %v126 = vstv %s125
    %127 = vst [vmem:[#allocation4 + $0x7] sm:$0x1] %v126
    %s128 = sld [smem:[#allocation5 + $0x80]]
    %s129 = scalar_lea.vmem %s2, %s128
    %v130 = vld [vmem:[%s129] sm:$0x1]
    %131 = vst.msk [vmem:[#allocation2 + $0x8] sm:$0x1] %vm49, %v130
    %132 = vst.msk [vmem:[#allocation3 + $0x1] sm:$0x1] %vm49, %v130
    %s133 = sld [smem:[#allocation8 + $0x80]]
    %s134 = scvt.s32.f32 %s133
    %s135 = ssub.f32 %s134, 1.0
    %s136 = smul.f32 %s135, 1e+09
    %v137 = vstv %s136
    %138 = vst [vmem:[#allocation4 + $0x8] sm:$0x1] %v137
    %s139 = sld [smem:[#allocation5 + $0x81]]
    %s140 = scalar_lea.vmem %s2, %s139
    %v141 = vld [vmem:[%s140] sm:$0x1]
    %142 = vst.msk [vmem:[#allocation2 + $0x9] sm:$0x1] %vm49, %v141
    %s143 = sld [smem:[#allocation8 + $0x81]]
    %s144 = scvt.s32.f32 %s143
    %s145 = ssub.f32 %s144, 1.0
    %s146 = smul.f32 %s145, 1e+09
    %v147 = vstv %s146
    %148 = vst [vmem:[#allocation4 + $0x9] sm:$0x1] %v147
    %s149 = sld [smem:[#allocation5 + $0x82]]
    %s150 = scalar_lea.vmem %s2, %s149
    %v151 = vld [vmem:[%s150] sm:$0x1]
    %152 = vst.msk [vmem:[#allocation2 + $0xa] sm:$0x1] %vm49, %v151
    %s153 = sld [smem:[#allocation8 + $0x82]]
    %s154 = scvt.s32.f32 %s153
    %s155 = ssub.f32 %s154, 1.0
    %s156 = smul.f32 %s155, 1e+09
    %v157 = vstv %s156
    %158 = vst [vmem:[#allocation4 + $0xa] sm:$0x1] %v157
    %s159 = sld [smem:[#allocation5 + $0x83]]
    %s160 = scalar_lea.vmem %s2, %s159
    %v161 = vld [vmem:[%s160] sm:$0x1]
    %162 = vst.msk [vmem:[#allocation2 + $0xb] sm:$0x1] %vm49, %v161
    %s163 = sld [smem:[#allocation8 + $0x83]]
    %s164 = scvt.s32.f32 %s163
    %s165 = ssub.f32 %s164, 1.0
    %s166 = smul.f32 %s165, 1e+09
    %v167 = vstv %s166
    %168 = vst [vmem:[#allocation4 + $0xb] sm:$0x1] %v167
    %s169 = sld [smem:[#allocation5 + $0x84]]
    %s170 = scalar_lea.vmem %s2, %s169
    %v171 = vld [vmem:[%s170] sm:$0x1]
    %172 = vst.msk [vmem:[#allocation2 + $0xc] sm:$0x1] %vm49, %v171
    %s173 = sld [smem:[#allocation8 + $0x84]]
    %s174 = scvt.s32.f32 %s173
    %s175 = ssub.f32 %s174, 1.0
    %s176 = smul.f32 %s175, 1e+09
    %v177 = vstv %s176
    %178 = vst [vmem:[#allocation4 + $0xc] sm:$0x1] %v177
    %s179 = sld [smem:[#allocation5 + $0x85]]
    %s180 = scalar_lea.vmem %s2, %s179
    %v181 = vld [vmem:[%s180] sm:$0x1]
    %182 = vst.msk [vmem:[#allocation2 + $0xd] sm:$0x1] %vm49, %v181
    %s183 = sld [smem:[#allocation8 + $0x85]]
    %s184 = scvt.s32.f32 %s183
    %s185 = ssub.f32 %s184, 1.0
    %s186 = smul.f32 %s185, 1e+09
    %v187 = vstv %s186
    %188 = vst [vmem:[#allocation4 + $0xd] sm:$0x1] %v187
    %s189 = sld [smem:[#allocation5 + $0x86]]
    %s190 = scalar_lea.vmem %s2, %s189
    %v191 = vld [vmem:[%s190] sm:$0x1]
    %192 = vst.msk [vmem:[#allocation2 + $0xe] sm:$0x1] %vm49, %v191
    %s193 = sld [smem:[#allocation8 + $0x86]]
    %s194 = scvt.s32.f32 %s193
    %s195 = ssub.f32 %s194, 1.0
    %s196 = smul.f32 %s195, 1e+09
    %v197 = vstv %s196
    %198 = vst [vmem:[#allocation4 + $0xe] sm:$0x1] %v197
    %s199 = sld [smem:[#allocation5 + $0x87]]
    %s200 = scalar_lea.vmem %s2, %s199
    %v201 = vld [vmem:[%s200] sm:$0x1]
    %202 = vst.msk [vmem:[#allocation2 + $0xf] sm:$0x1] %vm49, %v201
    %s203 = sld [smem:[#allocation8 + $0x87]]
    %s204 = scvt.s32.f32 %s203
    %s205 = ssub.f32 %s204, 1.0
    %s206 = smul.f32 %s205, 1e+09
    %v207 = vstv %s206
    %208 = vst [vmem:[#allocation4 + $0xf] sm:$0x1] %v207
    %v209 = vld [vmem:[%s2 + $0x68] sm:$0xff]
    %v210 = vld [vmem:[#allocation2] sm:$0xff]
    %v211 = vld [vmem:[#allocation2 + $0x8] sm:$0xff]
    %v212 = vadd.f32 %v210, %v209
    %v213 = vadd.f32 %v211, %v209
    %v214 = vld [vmem:[#allocation3] sm:$0x3]
    %v215 = vlaneseq
    %v216 = vshrl.u32 %v215, 7
    %v217 = vsub.s32 0, %v216
    %v218 = vrot.slane %v209, %v217
    %v219 = vadd.f32 %v214, %v218
    %v220 = vld [vmem:[#allocation4] sm:$0xff]
    %v221 = vld [vmem:[#allocation4 + $0x8] sm:$0xff]
    %v222 = vld [vmem:[%s3] sm:$0xff]
    %v223 = vld [vmem:[%s3 + $0x8] sm:$0xff]
    %v224 = vld [vmem:[%s3 + $0x10] sm:$0xff]
    %v225 = vld [vmem:[%s3 + $0x18] sm:$0xff]
    %v226 = vld [vmem:[%s3 + $0x20] sm:$0xff]
    %v227 = vld [vmem:[%s3 + $0x28] sm:$0xff]
    %v228 = vld [vmem:[%s3 + $0x30] sm:$0xff]
    %v229 = vld [vmem:[%s3 + $0x38] sm:$0xff]
    %v230 = vld [vmem:[%s3 + $0x40] sm:$0xff]
    %v231 = vld [vmem:[%s3 + $0x48] sm:$0xff]
    %v232 = vld [vmem:[%s3 + $0x50] sm:$0xff]
    %v233 = vld [vmem:[%s3 + $0x58] sm:$0xff]
    %v234 = vld [vmem:[%s3 + $0x60] sm:$0xff]
    %v235 = vld [vmem:[%s3 + $0x68] sm:$0xff]
    %v236 = vld [vmem:[%s3 + $0x70] sm:$0xff]
    %v237 = vld [vmem:[%s3 + $0x78] sm:$0xff]
    %v238 = vld [vmem:[%s3 + $0x80] sm:$0xff]
    %v239 = vld [vmem:[%s3 + $0x88] sm:$0xff]
    %v240 = vld [vmem:[%s3 + $0x90] sm:$0xff]
    %v241 = vld [vmem:[%s3 + $0x98] sm:$0xff]
    %v242 = vld [vmem:[%s3 + $0xa0] sm:$0xff]
    %v243 = vld [vmem:[%s3 + $0xa8] sm:$0xff]
    %v244 = vld [vmem:[%s3 + $0xb0] sm:$0xff]
    %v245 = vld [vmem:[%s3 + $0xb8] sm:$0xff]
    %v246 = vld [vmem:[%s3 + $0xc0] sm:$0xff]
    %v247 = vld [vmem:[%s3 + $0xc8] sm:$0xff]
    %v248 = vld [vmem:[%s3 + $0xd0] sm:$0xff]
    %v249 = vld [vmem:[%s3 + $0xd8] sm:$0xff]
    %v250 = vld [vmem:[%s3 + $0xe0] sm:$0xff]
    %v251 = vld [vmem:[%s3 + $0xe8] sm:$0xff]
    %v252 = vld [vmem:[%s3 + $0xf0] sm:$0xff]
    %v253 = vld [vmem:[%s3 + $0xf8] sm:$0xff]
    %v254 = vld [vmem:[%s3 + $0x100] sm:$0xff]
    %v255 = vld [vmem:[%s3 + $0x108] sm:$0xff]
    %v256 = vld [vmem:[%s3 + $0x110] sm:$0xff]
    %v257 = vld [vmem:[%s3 + $0x118] sm:$0xff]
    %v258 = vld [vmem:[%s3 + $0x120] sm:$0xff]
    %v259 = vld [vmem:[%s3 + $0x128] sm:$0xff]
    %v260 = vld [vmem:[%s3 + $0x130] sm:$0xff]
    %v261 = vld [vmem:[%s3 + $0x138] sm:$0xff]
    %v262 = vld [vmem:[%s3 + $0x140] sm:$0xff]
    %v263 = vld [vmem:[%s3 + $0x148] sm:$0xff]
    %v264 = vld [vmem:[%s3 + $0x150] sm:$0xff]
    %v265 = vld [vmem:[%s3 + $0x158] sm:$0xff]
    %v266 = vld [vmem:[%s3 + $0x160] sm:$0xff]
    %v267 = vld [vmem:[%s3 + $0x168] sm:$0xff]
    %v268 = vld [vmem:[%s3 + $0x170] sm:$0xff]
    %v269 = vld [vmem:[%s3 + $0x178] sm:$0xff]
    %v270 = vld [vmem:[%s4] sm:$0xff]
    %v271 = vld [vmem:[%s4 + $0x8] sm:$0xff]
    %v272 = vld [vmem:[%s4 + $0x10] sm:$0xff]
    %v273 = vld [vmem:[%s4 + $0x18] sm:$0xff]
    %v274 = vld [vmem:[%s4 + $0x20] sm:$0xff]
    %v275 = vld [vmem:[%s4 + $0x28] sm:$0xff]
    %v276 = vld [vmem:[%s4 + $0x30] sm:$0xff]
    %v277 = vld [vmem:[%s4 + $0x38] sm:$0xff]
    %v278 = vld [vmem:[%s4 + $0x40] sm:$0xff]
    %v279 = vld [vmem:[%s4 + $0x48] sm:$0xff]
    %v280 = vld [vmem:[%s4 + $0x50] sm:$0xff]
    %v281 = vld [vmem:[%s4 + $0x58] sm:$0xff]
    %v282 = vld [vmem:[%s4 + $0x60] sm:$0xff]
    %v283 = vld [vmem:[%s4 + $0x68] sm:$0xff]
    %v284 = vlaneseq
    %v285 = vshrl.u32 %v284, 7
    %v286 = vsub.s32 0, %v285
    %v287 = vrot.slane %v282, %v286
    %vm288 = vcmask 261120
    %v290 = vsel %vm288, %v219, 0
    %292 = vmatprep.subr.mxu0 0.0
    %293 = vmatpush1.msra.mxu0 0.0
    %294 = vmatprep.subr.mxu0 0.0
    %295 = vmatpush1.msra.mxu0 0.0
    %296 = vmatprep.subr.mxu0 0.0
    %297 = vmatpush1.msra.mxu0 0.0
    %298 = vmatprep.subr.mxu0 0.0
    %299 = vmatpush1.msra.mxu0 0.0
    %300 = vmatprep.subr.mxu0 0.0
    %301 = vmatpush1.msra.mxu0 0.0
    %302 = vmatprep.subr.mxu0 0.0
    %303 = vmatpush1.msra.mxu0 0.0
    %304 = vmatprep.subr.mxu0 0.0
    %305 = vmatpush1.msra.mxu0 0.0
    %306 = vmatprep.subr.mxu0 0.0
    %307 = vmatpush1.msra.mxu0 0.0
    %308 = vmatprep.subr.mxu0 0.0
    %309 = vmatpush1.msra.mxu0 0.0
    %310 = vmatprep.subr.mxu0 0.0
    %311 = vmatpush1.msra.mxu0 0.0
    %312 = vmatprep.subr.mxu0 0.0
    %313 = vmatpush1.msra.mxu0 0.0
    %314 = vmatprep.subr.mxu0 0.0
    %315 = vmatpush1.msra.mxu0 0.0
    %316 = vmatprep.subr.mxu0 0.0
    %317 = vmatpush1.msra.mxu0 %v225
    %318 = vmatprep.subr.mxu0 0.0
    %319 = vmatpush1.msra.mxu0 %v224
    %320 = vmatprep.subr.mxu0 0.0
    %321 = vmatpush1.msra.mxu0 %v223
    %322 = vmatprep.subr.mxu0 0.0
    %323 = vmatpush1.msra.mxu0 %v222
    %324 = vmatprep.subr.mxu0 0.0
    %325 = vmatpush2.msra.mxu0 0.0
    %326 = vmatprep.subr.mxu0 0.0
    %327 = vmatpush2.msra.mxu0 0.0
    %328 = vmatprep.subr.mxu0 0.0
    %329 = vmatpush2.msra.mxu0 0.0
    %330 = vmatprep.subr.mxu0 0.0
    %331 = vmatpush2.msra.mxu0 0.0
    %332 = vmatprep.subr.mxu0 0.0
    %333 = vmatpush2.msra.mxu0 0.0
    %334 = vmatprep.subr.mxu0 0.0
    %335 = vmatpush2.msra.mxu0 0.0
    %336 = vmatprep.subr.mxu0 0.0
    %337 = vmatpush2.msra.mxu0 0.0
    %338 = vmatprep.subr.mxu0 0.0
    %339 = vmatpush2.msra.mxu0 0.0
    %340 = vmatprep.subr.mxu0 0.0
    %341 = vmatpush2.msra.mxu0 0.0
    %342 = vmatprep.subr.mxu0 0.0
    %343 = vmatpush2.msra.mxu0 0.0
    %344 = vmatprep.subr.mxu0 0.0
    %345 = vmatpush2.msra.mxu0 0.0
    %346 = vmatprep.subr.mxu0 0.0
    %347 = vmatpush2.msra.mxu0 0.0
    %348 = vmatprep.subr.mxu0 0.0
    %349 = vmatpush2.msra.mxu0 0.0
    %350 = vmatprep.subr.mxu0 0.0
    %351 = vmatpush2.msra.mxu0 0.0
    %352 = vmatprep.subr.mxu0 0.0
    %353 = vmatpush2.msra.mxu0 0.0
    %354 = vmatprep.subr.mxu0 0.0
    %355 = vmatpush2.msra.mxu0 0.0
    %356 = vmatprep.mubr.f32.mxu0 0.0
    %357 = vmatmul.mubr.f32.gmra.mxu0 %v290
    %v358 = vpop.f32.mrf.mxu0
    %v359 = vadd.f32 %v287, %v358
    %v360 = vpop.f32.mrf.mxu0
    %361 = vdwg.mxu0
    %v362 = vlaneseq
    %v363 = vshrl.u32 %v362, 7
    %v364 = vsub.s32 1, %v363
    %v365 = vrot.slane %v282, %v364
    %v367 = vsel %vm288, %v212, 0
    %v370 = vsel %vm288, %v213, 0
    %372 = vmatprep.subr.mxu0 0.0
    %373 = vmatpush1.msra.mxu0 0.0
    %374 = vmatprep.subr.mxu0 0.0
    %375 = vmatpush1.msra.mxu0 0.0
    %376 = vmatprep.subr.mxu0 0.0
    %377 = vmatpush1.msra.mxu0 0.0
    %378 = vmatprep.subr.mxu0 0.0
    %379 = vmatpush1.msra.mxu0 0.0
    %380 = vmatprep.subr.mxu0 0.0
    %381 = vmatpush1.msra.mxu0 0.0
    %382 = vmatprep.subr.mxu0 0.0
    %383 = vmatpush1.msra.mxu0 0.0
    %384 = vmatprep.subr.mxu0 0.0
    %385 = vmatpush1.msra.mxu0 0.0
    %386 = vmatprep.subr.mxu0 0.0
    %387 = vmatpush1.msra.mxu0 0.0
    %388 = vmatprep.subr.mxu0 0.0
    %389 = vmatpush1.msra.mxu0 0.0
    %390 = vmatprep.subr.mxu0 0.0
    %391 = vmatpush1.msra.mxu0 0.0
    %392 = vmatprep.subr.mxu0 0.0
    %393 = vmatpush1.msra.mxu0 0.0
    %394 = vmatprep.subr.mxu0 0.0
    %395 = vmatpush1.msra.mxu0 0.0
    %396 = vmatprep.subr.mxu0 0.0
    %397 = vmatpush1.msra.mxu0 %v229
    %398 = vmatprep.subr.mxu0 0.0
    %399 = vmatpush1.msra.mxu0 %v228
    %400 = vmatprep.subr.mxu0 0.0
    %401 = vmatpush1.msra.mxu0 %v227
    %402 = vmatprep.subr.mxu0 0.0
    %403 = vmatpush1.msra.mxu0 %v226
    %404 = vmatprep.subr.mxu0 0.0
    %405 = vmatpush2.msra.mxu0 0.0
    %406 = vmatprep.subr.mxu0 0.0
    %407 = vmatpush2.msra.mxu0 0.0
    %408 = vmatprep.subr.mxu0 0.0
    %409 = vmatpush2.msra.mxu0 0.0
    %410 = vmatprep.subr.mxu0 0.0
    %411 = vmatpush2.msra.mxu0 0.0
    %412 = vmatprep.subr.mxu0 0.0
    %413 = vmatpush2.msra.mxu0 0.0
    %414 = vmatprep.subr.mxu0 0.0
    %415 = vmatpush2.msra.mxu0 0.0
    %416 = vmatprep.subr.mxu0 0.0
    %417 = vmatpush2.msra.mxu0 0.0
    %418 = vmatprep.subr.mxu0 0.0
    %419 = vmatpush2.msra.mxu0 0.0
    %420 = vmatprep.subr.mxu0 0.0
    %421 = vmatpush2.msra.mxu0 0.0
    %422 = vmatprep.subr.mxu0 0.0
    %423 = vmatpush2.msra.mxu0 0.0
    %424 = vmatprep.subr.mxu0 0.0
    %425 = vmatpush2.msra.mxu0 0.0
    %426 = vmatprep.subr.mxu0 0.0
    %427 = vmatpush2.msra.mxu0 0.0
    %428 = vmatprep.subr.mxu0 0.0
    %429 = vmatpush2.msra.mxu0 0.0
    %430 = vmatprep.subr.mxu0 0.0
    %431 = vmatpush2.msra.mxu0 0.0
    %432 = vmatprep.subr.mxu0 0.0
    %433 = vmatpush2.msra.mxu0 0.0
    %434 = vmatprep.subr.mxu0 0.0
    %435 = vmatpush2.msra.mxu0 0.0
    %436 = vmatprep.mubr.f32.mxu0 0.0
    %437 = vmatmul.mubr.f32.gmra.mxu0 %v367
    %v438 = vpop.f32.mrf.mxu0
    %v439 = vadd.f32 %v365, %v438
    %v440 = vpop.f32.mrf.mxu0
    %441 = vmatprep.mubr.f32.mxu0 0.0
    %442 = vmatmul.mubr.f32.gmra.mxu0 %v370
    %v443 = vpop.f32.mrf.mxu0
    %v444 = vadd.f32 %v365, %v443
    %v445 = vpop.f32.mrf.mxu0
    %446 = vdwg.mxu0
    %v447 = vlaneseq
    %v448 = vshrl.u32 %v447, 7
    %v449 = vsub.s32 2, %v448
    %v450 = vrot.slane %v282, %v449
    %451 = vmatprep.subr.mxu0 0.0
    %452 = vmatpush1.msra.mxu0 0.0
    %453 = vmatprep.subr.mxu0 0.0
    %454 = vmatpush1.msra.mxu0 0.0
    %455 = vmatprep.subr.mxu0 0.0
    %456 = vmatpush1.msra.mxu0 0.0
    %457 = vmatprep.subr.mxu0 0.0
    %458 = vmatpush1.msra.mxu0 0.0
    %459 = vmatprep.subr.mxu0 0.0
    %460 = vmatpush1.msra.mxu0 0.0
    %461 = vmatprep.subr.mxu0 0.0
    %462 = vmatpush1.msra.mxu0 0.0
    %463 = vmatprep.subr.mxu0 0.0
    %464 = vmatpush1.msra.mxu0 0.0
    %465 = vmatprep.subr.mxu0 0.0
    %466 = vmatpush1.msra.mxu0 0.0
    %467 = vmatprep.subr.mxu0 0.0
    %468 = vmatpush1.msra.mxu0 0.0
    %469 = vmatprep.subr.mxu0 0.0
    %470 = vmatpush1.msra.mxu0 0.0
    %471 = vmatprep.subr.mxu0 0.0
    %472 = vmatpush1.msra.mxu0 0.0
    %473 = vmatprep.subr.mxu0 0.0
    %474 = vmatpush1.msra.mxu0 0.0
    %475 = vmatprep.subr.mxu0 0.0
    %476 = vmatpush1.msra.mxu0 %v233
    %477 = vmatprep.subr.mxu0 0.0
    %478 = vmatpush1.msra.mxu0 %v232
    %479 = vmatprep.subr.mxu0 0.0
    %480 = vmatpush1.msra.mxu0 %v231
    %481 = vmatprep.subr.mxu0 0.0
    %482 = vmatpush1.msra.mxu0 %v230
    %483 = vmatprep.subr.mxu0 0.0
    %484 = vmatpush2.msra.mxu0 0.0
    %485 = vmatprep.subr.mxu0 0.0
    %486 = vmatpush2.msra.mxu0 0.0
    %487 = vmatprep.subr.mxu0 0.0
    %488 = vmatpush2.msra.mxu0 0.0
    %489 = vmatprep.subr.mxu0 0.0
    %490 = vmatpush2.msra.mxu0 0.0
    %491 = vmatprep.subr.mxu0 0.0
    %492 = vmatpush2.msra.mxu0 0.0
    %493 = vmatprep.subr.mxu0 0.0
    %494 = vmatpush2.msra.mxu0 0.0
    %495 = vmatprep.subr.mxu0 0.0
    %496 = vmatpush2.msra.mxu0 0.0
    %497 = vmatprep.subr.mxu0 0.0
    %498 = vmatpush2.msra.mxu0 0.0
    %499 = vmatprep.subr.mxu0 0.0
    %500 = vmatpush2.msra.mxu0 0.0
    %501 = vmatprep.subr.mxu0 0.0
    %502 = vmatpush2.msra.mxu0 0.0
    %503 = vmatprep.subr.mxu0 0.0
    %504 = vmatpush2.msra.mxu0 0.0
    %505 = vmatprep.subr.mxu0 0.0
    %506 = vmatpush2.msra.mxu0 0.0
    %507 = vmatprep.subr.mxu0 0.0
    %508 = vmatpush2.msra.mxu0 0.0
    %509 = vmatprep.subr.mxu0 0.0
    %510 = vmatpush2.msra.mxu0 0.0
    %511 = vmatprep.subr.mxu0 0.0
    %512 = vmatpush2.msra.mxu0 0.0
    %513 = vmatprep.subr.mxu0 0.0
    %514 = vmatpush2.msra.mxu0 0.0
    %515 = vmatprep.mubr.f32.mxu0 0.0
    %516 = vmatmul.mubr.f32.gmra.mxu0 %v367
    %v517 = vpop.f32.mrf.mxu0
    %v518 = vadd.f32 %v450, %v517
    %v519 = vpop.f32.mrf.mxu0
    %520 = vmatprep.mubr.f32.mxu0 0.0
    %521 = vmatmul.mubr.f32.gmra.mxu0 %v370
    %v522 = vpop.f32.mrf.mxu0
    %v523 = vadd.f32 %v450, %v522
    %v524 = vpop.f32.mrf.mxu0
    %525 = vdwg.mxu0
    %v528 = vunpack.c.l.s4 1966171168
    %v529 = vunpack.c.0.s8 %v528
    %v530 = vlaneseq
    %v531 = vshrl.u32 %v530, 7
    %v532 = vsub.s32 %v529, %v531
    %v533 = vrot.slane %v359, %v532
    %v534 = vcombine.high %v533, %v533
    %v536 = vunpack.c.l.s4 1966171168
    %v537 = vunpack.c.0.s8 %v536
    %v538 = vlaneseq
    %v539 = vshrl.u32 %v538, 7
    %v540 = vsub.s32 %v537, %v539
    %v541 = vrot.slane %v533, %v540
    %v543 = vunpack.c.l.s4 1966171168
    %v544 = vunpack.c.0.s8 %v543
    %v545 = vlaneseq
    %v546 = vshrl.u32 %v545, 7
    %v547 = vsub.s32 %v544, %v546
    %v548 = vrot.slane %v534, %v547
    %v549 = vlaneseq
    %v550 = vshrl.u32 %v549, 7
    %v551 = vsub.s32 0, %v550
    %v552 = vrot.slane %v541, %v551
    %v553 = vlaneseq
    %v554 = vshrl.u32 %v553, 7
    %v555 = vsub.s32 0, %v554
    %v556 = vrot.slane %v548, %v555
    %v559 = vmul.f32 %v552, %v439
    %v560 = vmul.f32 %v556, %v444
    %v562 = vsel %vm288, %v559, 0
    %v565 = vsel %vm288, %v560, 0
    %567 = vmatprep.subr.mxu0 0.0
    %568 = vmatpush1.msra.mxu0 0.0
    %569 = vmatprep.subr.mxu0 0.0
    %570 = vmatpush1.msra.mxu0 0.0
    %571 = vmatprep.subr.mxu0 0.0
    %572 = vmatpush1.msra.mxu0 0.0
    %573 = vmatprep.subr.mxu0 0.0
    %574 = vmatpush1.msra.mxu0 0.0
    %575 = vmatprep.subr.mxu0 0.0
    %576 = vmatpush1.msra.mxu0 0.0
    %577 = vmatprep.subr.mxu0 0.0
    %578 = vmatpush1.msra.mxu0 0.0
    %579 = vmatprep.subr.mxu0 0.0
    %580 = vmatpush1.msra.mxu0 0.0
    %581 = vmatprep.subr.mxu0 0.0
    %582 = vmatpush1.msra.mxu0 0.0
    %583 = vmatprep.subr.mxu0 0.0
    %584 = vmatpush1.msra.mxu0 0.0
    %585 = vmatprep.subr.mxu0 0.0
    %586 = vmatpush1.msra.mxu0 0.0
    %587 = vmatprep.subr.mxu0 0.0
    %588 = vmatpush1.msra.mxu0 0.0
    %589 = vmatprep.subr.mxu0 0.0
    %590 = vmatpush1.msra.mxu0 0.0
    %591 = vmatprep.subr.mxu0 0.0
    %592 = vmatpush1.msra.mxu0 %v281
    %593 = vmatprep.subr.mxu0 0.0
    %594 = vmatpush1.msra.mxu0 %v280
    %595 = vmatprep.subr.mxu0 0.0
    %596 = vmatpush1.msra.mxu0 %v279
    %597 = vmatprep.subr.mxu0 0.0
    %598 = vmatpush1.msra.mxu0 %v278
    %599 = vmatprep.subr.mxu0 0.0
    %600 = vmatpush2.msra.mxu0 0.0
    %601 = vmatprep.subr.mxu0 0.0
    %602 = vmatpush2.msra.mxu0 0.0
    %603 = vmatprep.subr.mxu0 0.0
    %604 = vmatpush2.msra.mxu0 0.0
    %605 = vmatprep.subr.mxu0 0.0
    %606 = vmatpush2.msra.mxu0 0.0
    %607 = vmatprep.subr.mxu0 0.0
    %608 = vmatpush2.msra.mxu0 0.0
    %609 = vmatprep.subr.mxu0 0.0
    %610 = vmatpush2.msra.mxu0 0.0
    %611 = vmatprep.subr.mxu0 0.0
    %612 = vmatpush2.msra.mxu0 0.0
    %613 = vmatprep.subr.mxu0 0.0
    %614 = vmatpush2.msra.mxu0 0.0
    %615 = vmatprep.subr.mxu0 0.0
    %616 = vmatpush2.msra.mxu0 0.0
    %617 = vmatprep.subr.mxu0 0.0
    %618 = vmatpush2.msra.mxu0 0.0
    %619 = vmatprep.subr.mxu0 0.0
    %620 = vmatpush2.msra.mxu0 0.0
    %621 = vmatprep.subr.mxu0 0.0
    %622 = vmatpush2.msra.mxu0 0.0
    %623 = vmatprep.subr.mxu0 0.0
    %624 = vmatpush2.msra.mxu0 0.0
    %625 = vmatprep.subr.mxu0 0.0
    %626 = vmatpush2.msra.mxu0 0.0
    %627 = vmatprep.subr.mxu0 0.0
    %628 = vmatpush2.msra.mxu0 0.0
    %629 = vmatprep.subr.mxu0 0.0
    %630 = vmatpush2.msra.mxu0 0.0
    %631 = vmatprep.mubr.f32.mxu0 0.0
    %632 = vmatmul.mubr.f32.gmra.mxu0 %v562
    %v633 = vpop.f32.mrf.mxu0
    %v634 = vadd.f32 %v220, %v633
    %v635 = vpop.f32.mrf.mxu0
    %636 = vmatprep.mubr.f32.mxu0 0.0
    %637 = vmatmul.mubr.f32.gmra.mxu0 %v565
    %v638 = vpop.f32.mrf.mxu0
    %v639 = vadd.f32 %v221, %v638
    %v640 = vpop.f32.mrf.mxu0
    %641 = vdwg.mxu0
    %v642 = vrot.slane %v634, 4
    %v643 = vmax.f32 %v634, %v642
    %v644 = vrot.slane %v643, 2
    %v645 = vmax.f32 %v643, %v644
    %v646 = vrot.slane %v645, 1
    %v647 = vmax.f32 %v645, %v646
    %v648 = vrot.slane %v639, 4
    %v649 = vmax.f32 %v639, %v648
    %v650 = vrot.slane %v649, 2
    %v651 = vmax.f32 %v649, %v650
    %v652 = vrot.slane %v651, 1
    %v653 = vmax.f32 %v651, %v652
    %v654 = vsub.f32 %v634, %v647
    %v655 = vsub.f32 %v639, %v653
    %v656 = vmul.f32 %v654, 1.442695
    %v657 = vpow.pop %v656
    %v658 = vmul.f32 %v655, 1.442695
    %v659 = vpow.pop %v658
    %v660 = vrot.slane %v657, 4
    %v661 = vadd.f32 %v657, %v660
    %v662 = vrot.slane %v661, 2
    %v663 = vadd.f32 %v661, %v662
    %v664 = vrot.slane %v663, 1
    %v665 = vadd.f32 %v663, %v664
    %v666 = vrot.slane %v659, 4
    %v667 = vadd.f32 %v659, %v666
    %v668 = vrot.slane %v667, 2
    %v669 = vadd.f32 %v667, %v668
    %v670 = vrot.slane %v669, 1
    %v671 = vadd.f32 %v669, %v670
    %v672 = vrcp.pop %v665
    %v673 = vmul.f32 %v657, %v672
    %v674 = vrcp.pop %v671
    %v675 = vmul.f32 %v659, %v674
    %676 = vmatprep.subr.mxu0 0.0
    %677 = vmatpush1.msra.mxu0 %v269
    %678 = vmatprep.subr.mxu0 0.0
    %679 = vmatpush1.msra.mxu0 %v268
    %680 = vmatprep.subr.mxu0 0.0
    %681 = vmatpush1.msra.mxu0 %v267
    %682 = vmatprep.subr.mxu0 0.0
    %683 = vmatpush1.msra.mxu0 %v266
    %684 = vmatprep.subr.mxu0 0.0
    %685 = vmatpush1.msra.mxu0 %v265
    %686 = vmatprep.subr.mxu0 0.0
    %687 = vmatpush1.msra.mxu0 %v264
    %688 = vmatprep.subr.mxu0 0.0
    %689 = vmatpush1.msra.mxu0 %v263
    %690 = vmatprep.subr.mxu0 0.0
    %691 = vmatpush1.msra.mxu0 %v262
    %692 = vmatprep.subr.mxu0 0.0
    %693 = vmatpush1.msra.mxu0 %v261
    %694 = vmatprep.subr.mxu0 0.0
    %695 = vmatpush1.msra.mxu0 %v260
    %696 = vmatprep.subr.mxu0 0.0
    %697 = vmatpush1.msra.mxu0 %v259
    %698 = vmatprep.subr.mxu0 0.0
    %699 = vmatpush1.msra.mxu0 %v258
    %700 = vmatprep.subr.mxu0 0.0
    %701 = vmatpush1.msra.mxu0 %v257
    %702 = vmatprep.subr.mxu0 0.0
    %703 = vmatpush1.msra.mxu0 %v256
    %704 = vmatprep.subr.mxu0 0.0
    %705 = vmatpush1.msra.mxu0 %v255
    %706 = vmatprep.subr.mxu0 0.0
    %707 = vmatpush1.msra.mxu0 %v254
    %708 = vmatprep.subr.mxu0 0.0
    %709 = vmatpush2.msra.mxu0 0.0
    %710 = vmatprep.subr.mxu0 0.0
    %711 = vmatpush2.msra.mxu0 0.0
    %712 = vmatprep.subr.mxu0 0.0
    %713 = vmatpush2.msra.mxu0 0.0
    %714 = vmatprep.subr.mxu0 0.0
    %715 = vmatpush2.msra.mxu0 0.0
    %716 = vmatprep.subr.mxu0 0.0
    %717 = vmatpush2.msra.mxu0 0.0
    %718 = vmatprep.subr.mxu0 0.0
    %719 = vmatpush2.msra.mxu0 0.0
    %720 = vmatprep.subr.mxu0 0.0
    %721 = vmatpush2.msra.mxu0 0.0
    %722 = vmatprep.subr.mxu0 0.0
    %723 = vmatpush2.msra.mxu0 0.0
    %724 = vmatprep.subr.mxu0 0.0
    %725 = vmatpush2.msra.mxu0 0.0
    %726 = vmatprep.subr.mxu0 0.0
    %727 = vmatpush2.msra.mxu0 0.0
    %728 = vmatprep.subr.mxu0 0.0
    %729 = vmatpush2.msra.mxu0 0.0
    %730 = vmatprep.subr.mxu0 0.0
    %731 = vmatpush2.msra.mxu0 0.0
    %732 = vmatprep.subr.mxu0 0.0
    %733 = vmatpush2.msra.mxu0 0.0
    %734 = vmatprep.subr.mxu0 0.0
    %735 = vmatpush2.msra.mxu0 0.0
    %736 = vmatprep.subr.mxu0 0.0
    %737 = vmatpush2.msra.mxu0 0.0
    %738 = vmatprep.subr.mxu0 0.0
    %739 = vmatpush2.msra.mxu0 0.0
    %740 = vmatprep.mubr.f32.mxu0 0.0
    %741 = vmatmul.mubr.f32.gmra.mxu0 %v673
    %v742 = vpop.f32.mrf.mxu0
    %v743 = vadd.f32 0.0, %v742
    %v744 = vpop.f32.mrf.mxu0
    %745 = vmatprep.mubr.f32.mxu0 0.0
    %746 = vmatmul.mubr.f32.gmra.mxu0 %v675
    %v747 = vpop.f32.mrf.mxu0
    %v748 = vadd.f32 0.0, %v747
    %v749 = vpop.f32.mrf.mxu0
    %750 = vdwg.mxu0
    %v751 = vmul.f32 %v743, %v518
    %v752 = vmul.f32 %v748, %v523
    %v753 = vsel %vm288, %v751, 0.0
    %v754 = vrot.slane %v753, 4
    %v755 = vadd.f32 %v753, %v754
    %v756 = vrot.slane %v755, 2
    %v757 = vadd.f32 %v755, %v756
    %v758 = vrot.slane %v757, 1
    %v759 = vadd.f32 %v757, %v758
    %v760 = vsel %vm288, %v752, 0.0
    %v761 = vrot.slane %v760, 4
    %v762 = vadd.f32 %v760, %v761
    %v763 = vrot.slane %v762, 2
    %v764 = vadd.f32 %v762, %v763
    %v765 = vrot.slane %v764, 1
    %v766 = vadd.f32 %v764, %v765
    %v767 = vlaneseq
    %v768 = vshrl.u32 %v767, 7
    %v769 = vsub.s32 3, %v768
    %v770 = vrot.slane %v282, %v769
    %vm773 = vcmask 1041409
    %v774 = vsel %vm773, %v766, %v759
    %v775 = vsel %vm288, %v774, 0
    %777 = vmatprep.subr.mxu0 0.0
    %778 = vmatpush1.msra.mxu0 0.0
    %779 = vmatprep.subr.mxu0 0.0
    %780 = vmatpush1.msra.mxu0 0.0
    %781 = vmatprep.subr.mxu0 0.0
    %782 = vmatpush1.msra.mxu0 0.0
    %783 = vmatprep.subr.mxu0 0.0
    %784 = vmatpush1.msra.mxu0 0.0
    %785 = vmatprep.subr.mxu0 0.0
    %786 = vmatpush1.msra.mxu0 0.0
    %787 = vmatprep.subr.mxu0 0.0
    %788 = vmatpush1.msra.mxu0 0.0
    %789 = vmatprep.subr.mxu0 0.0
    %790 = vmatpush1.msra.mxu0 0.0
    %791 = vmatprep.subr.mxu0 0.0
    %792 = vmatpush1.msra.mxu0 0.0
    %793 = vmatprep.subr.mxu0 0.0
    %794 = vmatpush1.msra.mxu0 0.0
    %795 = vmatprep.subr.mxu0 0.0
    %796 = vmatpush1.msra.mxu0 0.0
    %797 = vmatprep.subr.mxu0 0.0
    %798 = vmatpush1.msra.mxu0 0.0
    %799 = vmatprep.subr.mxu0 0.0
    %800 = vmatpush1.msra.mxu0 0.0
    %801 = vmatprep.subr.mxu0 0.0
    %802 = vmatpush1.msra.mxu0 %v237
    %803 = vmatprep.subr.mxu0 0.0
    %804 = vmatpush1.msra.mxu0 %v236
    %805 = vmatprep.subr.mxu0 0.0
    %806 = vmatpush1.msra.mxu0 %v235
    %807 = vmatprep.subr.mxu0 0.0
    %808 = vmatpush1.msra.mxu0 %v234
    %809 = vmatprep.subr.mxu0 0.0
    %810 = vmatpush2.msra.mxu0 0.0
    %811 = vmatprep.subr.mxu0 0.0
    %812 = vmatpush2.msra.mxu0 0.0
    %813 = vmatprep.subr.mxu0 0.0
    %814 = vmatpush2.msra.mxu0 0.0
    %815 = vmatprep.subr.mxu0 0.0
    %816 = vmatpush2.msra.mxu0 0.0
    %817 = vmatprep.subr.mxu0 0.0
    %818 = vmatpush2.msra.mxu0 0.0
    %819 = vmatprep.subr.mxu0 0.0
    %820 = vmatpush2.msra.mxu0 0.0
    %821 = vmatprep.subr.mxu0 0.0
    %822 = vmatpush2.msra.mxu0 0.0
    %823 = vmatprep.subr.mxu0 0.0
    %824 = vmatpush2.msra.mxu0 0.0
    %825 = vmatprep.subr.mxu0 0.0
    %826 = vmatpush2.msra.mxu0 0.0
    %827 = vmatprep.subr.mxu0 0.0
    %828 = vmatpush2.msra.mxu0 0.0
    %829 = vmatprep.subr.mxu0 0.0
    %830 = vmatpush2.msra.mxu0 0.0
    %831 = vmatprep.subr.mxu0 0.0
    %832 = vmatpush2.msra.mxu0 0.0
    %833 = vmatprep.subr.mxu0 0.0
    %834 = vmatpush2.msra.mxu0 0.0
    %835 = vmatprep.subr.mxu0 0.0
    %836 = vmatpush2.msra.mxu0 0.0
    %837 = vmatprep.subr.mxu0 0.0
    %838 = vmatpush2.msra.mxu0 0.0
    %839 = vmatprep.subr.mxu0 0.0
    %840 = vmatpush2.msra.mxu0 0.0
    %841 = vmatprep.mubr.f32.mxu0 0.0
    %842 = vmatmul.mubr.f32.gmra.mxu0 %v775
    %v843 = vpop.f32.mrf.mxu0
    %v844 = vadd.f32 %v770, %v843
    %v845 = vpop.f32.mrf.mxu0
    %846 = vdwg.mxu0
    %v847 = vadd.f32 %v219, %v844
    %vm848 = vcmask 254976
    %v849 = vsel %vm848, %v847, 0.0
    %850 = vadd.xlane.f32.xlu0 %v849
    %v851 = vpop.xlane.xlu0 %850
    %v852 = vrcp.pop 32.0
    %v853 = vmul.f32 %v851, %v852
    %v854 = vsub.f32 %v847, %v853
    %v855 = vmul.f32 %v854, %v854
    %v856 = vsel %vm848, %v855, 0.0
    %857 = vadd.xlane.f32.xlu0 %v856
    %v858 = vpop.xlane.xlu0 %857
    %v859 = vmul.f32 %v858, %v852
    %v860 = vadd.f32 %v859, 1e-12
    %v861 = vrsqrt.pop %v860
    %v862 = vmul.f32 %v854, %v861
    %v863 = vlaneseq
    %v864 = vshrl.u32 %v863, 7
    %v865 = vsub.s32 4, %v864
    %v866 = vrot.slane %v282, %v865
    %v867 = vmul.f32 %v862, %v866
    %v868 = vlaneseq
    %v869 = vshrl.u32 %v868, 7
    %v870 = vsub.s32 5, %v869
    %v871 = vrot.slane %v282, %v870
    %v872 = vadd.f32 %v867, %v871
    %v873 = vlaneseq
    %v874 = vshrl.u32 %v873, 7
    %v875 = vsub.s32 1, %v874
    %v876 = vrot.slane %v283, %v875
    %v878 = vsel %vm288, %v872, 0
    %880 = vmatprep.subr.mxu0 0.0
    %881 = vmatpush1.msra.mxu0 0.0
    %882 = vmatprep.subr.mxu0 0.0
    %883 = vmatpush1.msra.mxu0 0.0
    %884 = vmatprep.subr.mxu0 0.0
    %885 = vmatpush1.msra.mxu0 0.0
    %886 = vmatprep.subr.mxu0 0.0
    %887 = vmatpush1.msra.mxu0 0.0
    %888 = vmatprep.subr.mxu0 0.0
    %889 = vmatpush1.msra.mxu0 0.0
    %890 = vmatprep.subr.mxu0 0.0
    %891 = vmatpush1.msra.mxu0 0.0
    %892 = vmatprep.subr.mxu0 0.0
    %893 = vmatpush1.msra.mxu0 0.0
    %894 = vmatprep.subr.mxu0 0.0
    %895 = vmatpush1.msra.mxu0 0.0
    %896 = vmatprep.subr.mxu0 0.0
    %897 = vmatpush1.msra.mxu0 0.0
    %898 = vmatprep.subr.mxu0 0.0
    %899 = vmatpush1.msra.mxu0 0.0
    %900 = vmatprep.subr.mxu0 0.0
    %901 = vmatpush1.msra.mxu0 0.0
    %902 = vmatprep.subr.mxu0 0.0
    %903 = vmatpush1.msra.mxu0 0.0
    %904 = vmatprep.subr.mxu0 0.0
    %905 = vmatpush1.msra.mxu0 %v273
    %906 = vmatprep.subr.mxu0 0.0
    %907 = vmatpush1.msra.mxu0 %v272
    %908 = vmatprep.subr.mxu0 0.0
    %909 = vmatpush1.msra.mxu0 %v271
    %910 = vmatprep.subr.mxu0 0.0
    %911 = vmatpush1.msra.mxu0 %v270
    %912 = vmatprep.subr.mxu0 0.0
    %913 = vmatpush2.msra.mxu0 0.0
    %914 = vmatprep.subr.mxu0 0.0
    %915 = vmatpush2.msra.mxu0 0.0
    %916 = vmatprep.subr.mxu0 0.0
    %917 = vmatpush2.msra.mxu0 0.0
    %918 = vmatprep.subr.mxu0 0.0
    %919 = vmatpush2.msra.mxu0 0.0
    %920 = vmatprep.subr.mxu0 0.0
    %921 = vmatpush2.msra.mxu0 0.0
    %922 = vmatprep.subr.mxu0 0.0
    %923 = vmatpush2.msra.mxu0 0.0
    %924 = vmatprep.subr.mxu0 0.0
    %925 = vmatpush2.msra.mxu0 0.0
    %926 = vmatprep.subr.mxu0 0.0
    %927 = vmatpush2.msra.mxu0 0.0
    %928 = vmatprep.subr.mxu0 0.0
    %929 = vmatpush2.msra.mxu0 0.0
    %930 = vmatprep.subr.mxu0 0.0
    %931 = vmatpush2.msra.mxu0 0.0
    %932 = vmatprep.subr.mxu0 0.0
    %933 = vmatpush2.msra.mxu0 0.0
    %934 = vmatprep.subr.mxu0 0.0
    %935 = vmatpush2.msra.mxu0 0.0
    %936 = vmatprep.subr.mxu0 0.0
    %937 = vmatpush2.msra.mxu0 0.0
    %938 = vmatprep.subr.mxu0 0.0
    %939 = vmatpush2.msra.mxu0 0.0
    %940 = vmatprep.subr.mxu0 0.0
    %941 = vmatpush2.msra.mxu0 0.0
    %942 = vmatprep.subr.mxu0 0.0
    %943 = vmatpush2.msra.mxu0 0.0
    %944 = vmatprep.mubr.f32.mxu0 0.0
    %945 = vmatmul.mubr.f32.gmra.mxu0 %v878
    %v946 = vpop.f32.mrf.mxu0
    %v947 = vadd.f32 %v876, %v946
    %v948 = vpop.f32.mrf.mxu0
    %949 = vdwg.mxu0
    %v950 = vmul.f32 %v947, %v947
    %v951 = vmul.f32 %v947, %v950
    %v952 = vmul.f32 %v951, 0.044715
    %v953 = vadd.f32 %v947, %v952
    %v954 = vmul.f32 %v953, 0.7978846
    %v955 = vtanh.pop %v954
    %v956 = vadd.f32 %v955, 1.0
    %v957 = vmul.f32 %v956, 0.5
    %v958 = vmul.f32 %v947, %v957
    %v959 = vlaneseq
    %v960 = vshrl.u32 %v959, 7
    %v961 = vsub.s32 6, %v960
    %v962 = vrot.slane %v282, %v961
    %963 = vmatprep.subr.mxu0 0.0
    %964 = vmatpush1.msra.mxu0 %v253
    %965 = vmatprep.subr.mxu0 0.0
    %966 = vmatpush1.msra.mxu0 %v252
    %967 = vmatprep.subr.mxu0 0.0
    %968 = vmatpush1.msra.mxu0 %v251
    %969 = vmatprep.subr.mxu0 0.0
    %970 = vmatpush1.msra.mxu0 %v250
    %971 = vmatprep.subr.mxu0 0.0
    %972 = vmatpush1.msra.mxu0 %v249
    %973 = vmatprep.subr.mxu0 0.0
    %974 = vmatpush1.msra.mxu0 %v248
    %975 = vmatprep.subr.mxu0 0.0
    %976 = vmatpush1.msra.mxu0 %v247
    %977 = vmatprep.subr.mxu0 0.0
    %978 = vmatpush1.msra.mxu0 %v246
    %979 = vmatprep.subr.mxu0 0.0
    %980 = vmatpush1.msra.mxu0 %v245
    %981 = vmatprep.subr.mxu0 0.0
    %982 = vmatpush1.msra.mxu0 %v244
    %983 = vmatprep.subr.mxu0 0.0
    %984 = vmatpush1.msra.mxu0 %v243
    %985 = vmatprep.subr.mxu0 0.0
    %986 = vmatpush1.msra.mxu0 %v242
    %987 = vmatprep.subr.mxu0 0.0
    %988 = vmatpush1.msra.mxu0 %v241
    %989 = vmatprep.subr.mxu0 0.0
    %990 = vmatpush1.msra.mxu0 %v240
    %991 = vmatprep.subr.mxu0 0.0
    %992 = vmatpush1.msra.mxu0 %v239
    %993 = vmatprep.subr.mxu0 0.0
    %994 = vmatpush1.msra.mxu0 %v238
    %995 = vmatprep.subr.mxu0 0.0
    %996 = vmatpush2.msra.mxu0 0.0
    %997 = vmatprep.subr.mxu0 0.0
    %998 = vmatpush2.msra.mxu0 0.0
    %999 = vmatprep.subr.mxu0 0.0
    %1000 = vmatpush2.msra.mxu0 0.0
    %1001 = vmatprep.subr.mxu0 0.0
    %1002 = vmatpush2.msra.mxu0 0.0
    %1003 = vmatprep.subr.mxu0 0.0
    %1004 = vmatpush2.msra.mxu0 0.0
    %1005 = vmatprep.subr.mxu0 0.0
    %1006 = vmatpush2.msra.mxu0 0.0
    %1007 = vmatprep.subr.mxu0 0.0
    %1008 = vmatpush2.msra.mxu0 0.0
    %1009 = vmatprep.subr.mxu0 0.0
    %1010 = vmatpush2.msra.mxu0 0.0
    %1011 = vmatprep.subr.mxu0 0.0
    %1012 = vmatpush2.msra.mxu0 0.0
    %1013 = vmatprep.subr.mxu0 0.0
    %1014 = vmatpush2.msra.mxu0 0.0
    %1015 = vmatprep.subr.mxu0 0.0
    %1016 = vmatpush2.msra.mxu0 0.0
    %1017 = vmatprep.subr.mxu0 0.0
    %1018 = vmatpush2.msra.mxu0 0.0
    %1019 = vmatprep.subr.mxu0 0.0
    %1020 = vmatpush2.msra.mxu0 0.0
    %1021 = vmatprep.subr.mxu0 0.0
    %1022 = vmatpush2.msra.mxu0 0.0
    %1023 = vmatprep.subr.mxu0 0.0
    %1024 = vmatpush2.msra.mxu0 0.0
    %1025 = vmatprep.subr.mxu0 0.0
    %1026 = vmatpush2.msra.mxu0 0.0
    %1027 = vmatprep.mubr.f32.mxu0 0.0
    %1028 = vmatmul.mubr.f32.gmra.mxu0 %v958
    %v1029 = vpop.f32.mrf.mxu0
    %v1030 = vadd.f32 %v962, %v1029
    %v1031 = vpop.f32.mrf.mxu0
    %1032 = vdwg.mxu0
    %v1033 = vadd.f32 %v872, %v1030
    %v1034 = vsel %vm848, %v1033, 0.0
    %1035 = vadd.xlane.f32.xlu0 %v1034
    %v1036 = vpop.xlane.xlu0 %1035
    %v1037 = vmul.f32 %v1036, %v852
    %v1038 = vsub.f32 %v1033, %v1037
    %v1039 = vmul.f32 %v1038, %v1038
    %v1040 = vsel %vm848, %v1039, 0.0
    %1041 = vadd.xlane.f32.xlu0 %v1040
    %v1042 = vpop.xlane.xlu0 %1041
    %v1043 = vmul.f32 %v1042, %v852
    %v1044 = vadd.f32 %v1043, 1e-12
    %v1045 = vrsqrt.pop %v1044
    %v1046 = vmul.f32 %v1038, %v1045
    %v1047 = vlaneseq
    %v1048 = vshrl.u32 %v1047, 7
    %v1049 = vsub.s32 7, %v1048
    %v1050 = vrot.slane %v282, %v1049
    %v1051 = vmul.f32 %v1046, %v1050
    %v1052 = vlaneseq
    %v1053 = vshrl.u32 %v1052, 7
    %v1054 = vsub.s32 0, %v1053
    %v1055 = vrot.slane %v283, %v1054
    %v1056 = vadd.f32 %v1051, %v1055
    %v1057 = vlaneseq
    %v1058 = vshrl.u32 %v1057, 7
    %v1059 = vsub.s32 2, %v1058
    %v1060 = vrot.slane %v283, %v1059
    %v1062 = vsel %vm288, %v1056, 0
    %1064 = vmatprep.subr.mxu0 0.0
    %1065 = vmatpush1.msra.mxu0 0.0
    %1066 = vmatprep.subr.mxu0 0.0
    %1067 = vmatpush1.msra.mxu0 0.0
    %1068 = vmatprep.subr.mxu0 0.0
    %1069 = vmatpush1.msra.mxu0 0.0
    %1070 = vmatprep.subr.mxu0 0.0
    %1071 = vmatpush1.msra.mxu0 0.0
    %1072 = vmatprep.subr.mxu0 0.0
    %1073 = vmatpush1.msra.mxu0 0.0
    %1074 = vmatprep.subr.mxu0 0.0
    %1075 = vmatpush1.msra.mxu0 0.0
    %1076 = vmatprep.subr.mxu0 0.0
    %1077 = vmatpush1.msra.mxu0 0.0
    %1078 = vmatprep.subr.mxu0 0.0
    %1079 = vmatpush1.msra.mxu0 0.0
    %1080 = vmatprep.subr.mxu0 0.0
    %1081 = vmatpush1.msra.mxu0 0.0
    %1082 = vmatprep.subr.mxu0 0.0
    %1083 = vmatpush1.msra.mxu0 0.0
    %1084 = vmatprep.subr.mxu0 0.0
    %1085 = vmatpush1.msra.mxu0 0.0
    %1086 = vmatprep.subr.mxu0 0.0
    %1087 = vmatpush1.msra.mxu0 0.0
    %1088 = vmatprep.subr.mxu0 0.0
    %1089 = vmatpush1.msra.mxu0 %v277
    %1090 = vmatprep.subr.mxu0 0.0
    %1091 = vmatpush1.msra.mxu0 %v276
    %1092 = vmatprep.subr.mxu0 0.0
    %1093 = vmatpush1.msra.mxu0 %v275
    %1094 = vmatprep.subr.mxu0 0.0
    %1095 = vmatpush1.msra.mxu0 %v274
    %1096 = vmatprep.subr.mxu0 0.0
    %1097 = vmatpush2.msra.mxu0 0.0
    %1098 = vmatprep.subr.mxu0 0.0
    %1099 = vmatpush2.msra.mxu0 0.0
    %1100 = vmatprep.subr.mxu0 0.0
    %1101 = vmatpush2.msra.mxu0 0.0
    %1102 = vmatprep.subr.mxu0 0.0
    %1103 = vmatpush2.msra.mxu0 0.0
    %1104 = vmatprep.subr.mxu0 0.0
    %1105 = vmatpush2.msra.mxu0 0.0
    %1106 = vmatprep.subr.mxu0 0.0
    %1107 = vmatpush2.msra.mxu0 0.0
    %1108 = vmatprep.subr.mxu0 0.0
    %1109 = vmatpush2.msra.mxu0 0.0
    %1110 = vmatprep.subr.mxu0 0.0
    %1111 = vmatpush2.msra.mxu0 0.0
    %1112 = vmatprep.subr.mxu0 0.0
    %1113 = vmatpush2.msra.mxu0 0.0
    %1114 = vmatprep.subr.mxu0 0.0
    %1115 = vmatpush2.msra.mxu0 0.0
    %1116 = vmatprep.subr.mxu0 0.0
    %1117 = vmatpush2.msra.mxu0 0.0
    %1118 = vmatprep.subr.mxu0 0.0
    %1119 = vmatpush2.msra.mxu0 0.0
    %1120 = vmatprep.subr.mxu0 0.0
    %1121 = vmatpush2.msra.mxu0 0.0
    %1122 = vmatprep.subr.mxu0 0.0
    %1123 = vmatpush2.msra.mxu0 0.0
    %1124 = vmatprep.subr.mxu0 0.0
    %1125 = vmatpush2.msra.mxu0 0.0
    %1126 = vmatprep.subr.mxu0 0.0
    %1127 = vmatpush2.msra.mxu0 0.0
    %1128 = vmatprep.mubr.f32.mxu0 0.0
    %1129 = vmatmul.mubr.f32.gmra.mxu0 %v1062
    %v1130 = vpop.f32.mrf.mxu0
    %v1131 = vadd.f32 %v1060, %v1130
    %v1132 = vpop.f32.mrf.mxu0
    %1133 = vdwg.mxu0
    %vm1134 = vcmask 25600
    %1135 = vst.msk [vmem:[#allocation10] sm:$0x3] %vm1134, %v1131
    // Predicated region
    $region30: #{base_model_forward.1} parent=1 // pred_check
      _
    $region31: #{base_model_forward.1} parent=1 // pred_check_branch
      %1137 = sbr.rel (0) target = $region33
    $region32: #{base_model_forward.1} parent=1 // pred_region
      %s1139 = ssub.s32 32, 32
      %1140 = vsyncadd [#allocation6], %s1139
      %s1142 = sshll.u32 [#allocation10], 4
      %s1143 = int_to_ptr.vmem [resolvable:$true] %s1142
      %1145 = dma.vmem_to_hbm [thread:$0]  %s1143, 32, %s5, [#allocation6]
    $region33: #{base_model_forward.1} parent=1 // pred_fallthru
      _
    // Predicated region
    $region34: #{base_model_forward.1} parent=1 // pred_check
      _
    $region35: #{base_model_forward.1} parent=1 // pred_check_branch
      %1147 = sbr.rel (0) target = $region37
    $region36: #{base_model_forward.1} parent=1 // pred_region
      %1148 = dma.done [#allocation6], 32
    $region37: #{base_model_forward.1} parent=1 // pred_fallthru
      _
    %1149 = vsyncpa [#allocation6], 1
    %1150 = vsyncpa [#allocation7], 1
    %1151 = vsyncpa [#allocation9], 1

</llo_original>
